<compile_context>
chip_gen: v5e
topology: v5e:2x2
jax: 0.10.0
libtpu: 0.0.40
codegen_flags: <defaults>
</compile_context>

<pallas_src>
import math

import jax
import jax.numpy as jnp
from jax.experimental import pallas as pl
from jax.experimental.pallas import tpu as pltpu


def _layernorm(x, gamma, beta, eps=1e-5):
    """One-pass LayerNorm over the last axis (biased variance, torch eps)."""
    mu = jnp.mean(x, axis=-1, keepdims=True)
    ms = jnp.mean(x * x, axis=-1, keepdims=True)
    var = jnp.maximum(ms - mu * mu, 0.0)
    return (x - mu) * jax.lax.rsqrt(var + eps) * gamma + beta


def _mlpmix_decoder_kernel(
    enc_ref,     # (bblk*W, D)   io_dtype   encoder rows (batch-major slab)
    fut_ref,     # (bblk*F, D)   io_dtype   future rows  (batch-major slab)
    tn_g_ref,    # (1, D)        f32        time_norm gamma
    tn_b_ref,    # (1, D)        f32        time_norm beta
    tw_enc_ref,  # (F, W)        bf16       conv weight, encoder columns
    tw_fut_ref,  # (F, F)        bf16       conv weight, future columns
    tb_ref,      # (F, 1)        f32        conv bias
    fn_g_ref,    # (1, D)        f32        feature_norm gamma
    fn_b_ref,    # (1, D)        f32        feature_norm beta
    w1t_ref,     # (D, d_ff)     bf16       feature_mixer Linear1 (transposed)
    b1_ref,      # (1, d_ff)     f32
    w2t_ref,     # (d_ff, D)     bf16       feature_mixer Linear2 (transposed)
    b2_ref,      # (1, D)        f32
    out_ref,     # (bblk*F, D)   io_dtype
):
    f32 = jnp.float32
    bf16 = jnp.bfloat16
    F, W = tw_enc_ref.shape
    D = enc_ref.shape[1]
    bblk = fut_ref.shape[0] // F

    enc = enc_ref[...].astype(f32)               # (bblk*W, D)
    fut = fut_ref[...].astype(f32)               # (bblk*F, D)

    # time_norm (LayerNorm over D). LN(concat) == concat(LN(enc), LN(fut)),
    # so the torch.cat is never materialized.
    ln_enc = _layernorm(enc, tn_g_ref[...], tn_b_ref[...])
    ln_fut = _layernorm(fut, tn_g_ref[...], tn_b_ref[...])

    # time_mixer: Conv1d(n_past, n_future, 1) == per-example contraction over
    # the time axis. Batched einsum on 3-D views (reshape is free when W and
    # F are multiples of 8) -> no block-diagonal kron, no structural zeros.
    ln_enc3 = ln_enc.reshape(bblk, W, D).astype(bf16)
    ln_fut3 = ln_fut.reshape(bblk, F, D).astype(bf16)
    twe = jnp.broadcast_to(tw_enc_ref[...], (bblk, F, W))
    twf = jnp.broadcast_to(tw_fut_ref[...], (bblk, F, F))
    out_t3 = jnp.einsum("bfw,bwd->bfd", twe, ln_enc3,
                        preferred_element_type=f32)
    out_t3 = out_t3 + jnp.einsum("bfh,bhd->bfd", twf, ln_fut3,
                                 preferred_element_type=f32)
    out_t3 = jnp.maximum(out_t3 + tb_ref[...][None, :, :], 0.0)   # Dropout = id
    out_t = out_t3.reshape(bblk * F, D)

    # residual with the last n_future time steps of input_t == x_future itself
    input_f = out_t + fut                                         # (bblk*F, D)

    # feature_norm + feature_mixer (Linear -> ReLU -> Linear, Dropouts = id):
    # tall-M 2-D matmuls, bf16 operands, f32 accumulation on the MXU.
    ln_f = _layernorm(input_f, fn_g_ref[...], fn_b_ref[...])
    h = jnp.dot(ln_f.astype(bf16), w1t_ref[...], preferred_element_type=f32)
    h = jnp.maximum(h + b1_ref[...], 0.0)                         # (bblk*F, d_ff)
    out_f = jnp.dot(h.astype(bf16), w2t_ref[...], preferred_element_type=f32)
    out_f = out_f + b2_ref[...]

    out_ref[...] = (out_f + input_f).astype(out_ref.dtype)


def mlpmix_decoder_forward(x_future, encoder_output_net, params, *,
                           bblk=None, io_dtype=jnp.bfloat16):
    """MLPMixDecoderModule.forward (eval mode, ts_skip_size == 1).

    x_future:           (B, F, D) future features (F = forecasting horizon)
    encoder_output_net: (B, W, D) encoder output over the lookback window
    Returns (B, F, D) in x_future.dtype. Activation I/O at the pallas_call
    boundary uses `io_dtype` (bf16 by default); LN stats / accumulation are f32.
    """
    B, F, D = x_future.shape
    Bw, W, Dw = encoder_output_net.shape
    assert (Bw, Dw) == (B, D)
    d_ff = params["w1t"].shape[1]
    itemsize = jnp.dtype(io_dtype).itemsize

    # ---- VMEM footprint estimate per grid step (worst case: double-buffered)
    def _vmem_bytes(bb):
        act = 2 * (bb * W * D + 2 * bb * F * D) * itemsize           # enc/fut/out
        wgt = 2 * (2 * (D * d_ff + d_ff * D + F * W + F * F)         # bf16 weights
                   + 4 * (5 * D + d_ff + F))                         # f32 bias/norm
        tmp = 4 * (2 * bb * W * D + 6 * bb * F * D + bb * F * d_ff)  # f32 temporaries
        return act + wgt + tmp

    try:
        vmem_cap = int(pltpu.get_tpu_info().vmem_capacity_bytes)
    except Exception:
        vmem_cap = 64 * 1024 * 1024        # v7x per-TensorCore VMEM (smallest gen)
    budget = int(0.7 * vmem_cap)

    # ---- batch block: a divisor of B (no padding pass over HBM), legal for
    # the (8,128) BlockSpec rule when nb > 1, sized for MXU M-fill, and only
    # split into >= 2 grid blocks (v7x: two TensorCores) when each block still
    # carries >= 128-256 output rows.
    def _legal(bb):
        return bb == B or ((bb * W) % 8 == 0 and (bb * F) % 8 == 0)

    divisors = [d for d in range(1, B + 1) if B % d == 0 and _legal(d)]
    feasible = [d for d in divisors if _vmem_bytes(d) <= budget] or [min(divisors)]

    if bblk is None:
        def pick(cands):
            even = [d for d in cands if (B // d) % 2 == 0]   # balance the 2 TCs
            pool = even or cands
            return min(pool, key=lambda d: abs(d * F - 512))
        tiers = (
            [d for d in feasible if d * F >= 256 and B // d >= 2],
            [d for d in feasible if d * F >= 128 and B // d >= 2],
            [d for d in feasible if d * F >= 256],
        )
        bblk = next((pick(t) for t in tiers if t), max(feasible))
    else:
        cands = [d for d in feasible if d <= bblk]
        bblk = max(cands) if cands else min(feasible)
    nb = B // bblk

    # ---- operand prep (once per call; bf16 operands for the MXU)
    bf = jnp.bfloat16
    enc2 = encoder_output_net.reshape(B * W, D).astype(io_dtype)
    fut2 = x_future.reshape(B * F, D).astype(io_dtype)
    tw = params["tw"]                              # (F, W + F)
    tw_enc = tw[:, :W].astype(bf)                  # (F, W)
    tw_fut = tw[:, W:].astype(bf)                  # (F, F)
    tb = params["tb"].astype(jnp.float32)          # (F, 1)
    w1t = params["w1t"].astype(bf)                 # (D, d_ff)
    w2t = params["w2t"].astype(bf)                 # (d_ff, D)

    # ---- advisory cost: useful FLOPs only, weights counted once.
    flops = 2 * B * F * D * ((W + F) + 2 * d_ff)
    act_bytes = (B * W * D + 2 * B * F * D) * itemsize
    wgt_bytes = 2 * (D * d_ff + d_ff * D + F * W + F * F) + 4 * (5 * D + d_ff + F)
    cost = pl.CostEstimate(flops=int(flops),
                           transcendentals=int(B * (W + 2 * F)),   # rsqrt per LN row
                           bytes_accessed=int(act_bytes + wgt_bytes))

    vmem_limit = int(min(vmem_cap,
                         max(32 * 1024 * 1024,
                             int(1.5 * _vmem_bytes(bblk)) + (4 << 20))))

    def _const_spec(shape, single_buffer):
        if single_buffer:
            return pl.BlockSpec(shape, lambda b: (0,) * len(shape),
                                pipeline_mode=pl.Buffered(1))
        return pl.BlockSpec(shape, lambda b: (0,) * len(shape))

    def _run(single_buffer_weights):
        cs = lambda shape: _const_spec(shape, single_buffer_weights)
        return pl.pallas_call(
            _mlpmix_decoder_kernel,
            out_shape=jax.ShapeDtypeStruct((B * F, D), io_dtype),
            grid=(nb,),
            in_specs=[
                pl.BlockSpec((bblk * W, D), lambda b: (b, 0)),   # encoder rows
                pl.BlockSpec((bblk * F, D), lambda b: (b, 0)),   # future rows
                cs((1, D)), cs((1, D)),                          # time_norm g / b
                cs((F, W)), cs((F, F)), cs((F, 1)),              # conv W_enc / W_fut / bias
                cs((1, D)), cs((1, D)),                          # feature_norm g / b
                cs((D, d_ff)), cs((1, d_ff)),                    # W1^T, b1
                cs((d_ff, D)), cs((1, D)),                       # W2^T, b2
            ],
            out_specs=pl.BlockSpec((bblk * F, D), lambda b: (b, 0)),
            compiler_params=pltpu.CompilerParams(
                dimension_semantics=("parallel",),
                vmem_limit_bytes=vmem_limit),
            cost_estimate=cost,
        )(enc2, fut2,
          params["tn_g"], params["tn_b"], tw_enc, tw_fut, tb,
          params["fn_g"], params["fn_b"], w1t, params["b1"], w2t, params["b2"])

    try:
        out2 = _run(True)          # single-buffer the grid-invariant weights
    except Exception:
        out2 = _run(False)         # fallback: default double buffering

    return out2.reshape(B, F, D).astype(x_future.dtype)


def init_params(key, d_model, window_size, forecasting_horizon, d_ff=None,
                ts_skip_size=1):
    if d_ff is None:
        d_ff = 2 * d_model
    n_past = int(math.ceil(window_size / ts_skip_size)) + \
             int(math.ceil(forecasting_horizon / ts_skip_size))
    n_future = int(math.ceil(forecasting_horizon / ts_skip_size))

    ks = jax.random.split(key, 6)
    # Conv1d(n_past, n_future, 1): weight (n_future, n_past, 1) -> (n_future, n_past)
    tw = jax.random.normal(ks[0], (n_future, n_past), jnp.float32) * 0.1
    tb = jax.random.normal(ks[1], (n_future, 1), jnp.float32) * 0.1
    # Linear(d_model, d_ff): stored transposed (d_model, d_ff)
    w1t = jax.random.normal(ks[2], (d_model, d_ff), jnp.float32) * 0.1
    b1 = jax.random.normal(ks[3], (1, d_ff), jnp.float32) * 0.1
    # Linear(d_ff, d_model): stored transposed (d_ff, d_model)
    w2t = jax.random.normal(ks[4], (d_ff, d_model), jnp.float32) * 0.1
    b2 = jax.random.normal(ks[5], (1, d_model), jnp.float32) * 0.1

    return dict(
        tn_g=jnp.ones((1, d_model), jnp.float32),
        tn_b=jnp.zeros((1, d_model), jnp.float32),
        tw=tw, tb=tb,
        fn_g=jnp.ones((1, d_model), jnp.float32),
        fn_b=jnp.zeros((1, d_model), jnp.float32),
        w1t=w1t, b1=b1, w2t=w2t, b2=b2,
    )


def _reference_f32(x_future, encoder_output_net, p):
    """Pure-JAX f32 reference of the PyTorch forward (ts_skip_size=1, eval mode)."""
    input_t = jnp.concatenate([encoder_output_net, x_future], axis=1)
    out_t = _layernorm(input_t, p["tn_g"], p["tn_b"])
    out_t = jnp.einsum("fp,bpd->bfd", p["tw"], out_t) + p["tb"][None]
    out_t = jnp.maximum(out_t, 0.0)
    F = x_future.shape[1]
    input_f = out_t + input_t[:, -F:, :]
    nf = _layernorm(input_f, p["fn_g"], p["fn_b"])
    h = jnp.maximum(nf @ p["w1t"] + p["b1"], 0.0)
    out_f = h @ p["w2t"] + p["b2"]
    return out_f + input_f


def _reference_mixed(x_future, encoder_output_net, p, io_dtype=jnp.bfloat16):
    """Reference mirroring the kernel's bf16 I/O + bf16-matmul / f32-accum precision."""
    bf = jnp.bfloat16
    f32 = jnp.float32
    W = encoder_output_net.shape[1]
    xf = x_future.astype(io_dtype).astype(f32)
    en = encoder_output_net.astype(io_dtype).astype(f32)
    ln_e = _layernorm(en, p["tn_g"], p["tn_b"])
    ln_x = _layernorm(xf, p["tn_g"], p["tn_b"])
    out_t = (jnp.einsum("fw,bwd->bfd", p["tw"][:, :W].astype(bf), ln_e.astype(bf),
                        preferred_element_type=f32)
             + jnp.einsum("fh,bhd->bfd", p["tw"][:, W:].astype(bf), ln_x.astype(bf),
                          preferred_element_type=f32))
    out_t = jnp.maximum(out_t + p["tb"][None], 0.0)
    input_f = out_t + xf
    nf = _layernorm(input_f, p["fn_g"], p["fn_b"])
    h = jnp.maximum(
        jnp.einsum("bfd,dk->bfk", nf.astype(bf), p["w1t"].astype(bf),
                   preferred_element_type=f32) + p["b1"], 0.0)
    out_f = jnp.einsum("bfk,kd->bfd", h.astype(bf), p["w2t"].astype(bf),
                       preferred_element_type=f32) + p["b2"]
    res = out_f + input_f
    return res.astype(io_dtype).astype(x_future.dtype)


if __name__ == "__main__":
    B = 4
    d_model = 128            # multiple of 128 -> lane-dense loads / stores
    window_size = 16
    forecasting_horizon = 8

    key = jax.random.PRNGKey(0)
    k_x, k_enc, k_p = jax.random.split(key, 3)
    x_future = jax.random.normal(k_x, (B, forecasting_horizon, d_model), jnp.float32)
    encoder_output_net = jax.random.normal(k_enc, (B, window_size, d_model), jnp.float32)
    # encoder_output_layer / hx1 / hx2 are unused by this module's forward.

    params = init_params(k_p, d_model, window_size, forecasting_horizon)

    out = mlpmix_decoder_forward(x_future, encoder_output_net, params)
    out = jax.block_until_ready(out)

    ref_mixed = _reference_mixed(x_future, encoder_output_net, params)
    ref_f32 = _reference_f32(x_future, encoder_output_net, params)

    assert out.shape == (B, forecasting_horizon, d_model)
    assert out.dtype == x_future.dtype
    # exact-structure check (same bf16 I/O + bf16-matmul precision as the kernel)
    assert jnp.allclose(out, ref_mixed, atol=2e-2, rtol=2e-2), \
        float(jnp.max(jnp.abs(out - ref_mixed)))
    # sanity check vs the full-f32 PyTorch-equivalent semantics
    assert jnp.allclose(out, ref_f32, atol=2.5e-1, rtol=1.5e-1), \
        float(jnp.max(jnp.abs(out - ref_f32)))

    print("KERNEL_OK")
</pallas_src>

<mosaic_0001>
module attributes {stable_mosaic.version = 11 : i64} {
  func.func @_mlpmix_decoder_kernel(%arg0: i32, %arg1: memref<64x128xbf16, #tpu.memory_space<vmem>>, %arg2: memref<32x128xbf16, #tpu.memory_space<vmem>>, %arg3: memref<1x128xf32, #tpu.memory_space<vmem>>, %arg4: memref<1x128xf32, #tpu.memory_space<vmem>>, %arg5: memref<8x16xbf16, #tpu.memory_space<vmem>>, %arg6: memref<8x8xbf16, #tpu.memory_space<vmem>>, %arg7: memref<8x1xf32, #tpu.memory_space<vmem>>, %arg8: memref<1x128xf32, #tpu.memory_space<vmem>>, %arg9: memref<1x128xf32, #tpu.memory_space<vmem>>, %arg10: memref<128x256xbf16, #tpu.memory_space<vmem>>, %arg11: memref<1x256xf32, #tpu.memory_space<vmem>>, %arg12: memref<256x128xbf16, #tpu.memory_space<vmem>>, %arg13: memref<1x128xf32, #tpu.memory_space<vmem>>, %arg14: memref<32x128xbf16, #tpu.memory_space<vmem>>) attributes {dimension_semantics = [#tpu.dimension_semantics<parallel>], iteration_bounds = array<i64: 1>, scalar_prefetch = 0 : i64, scratch_operands = 0 : i64, tpu.core_type = #tpu.core_type<tc>, window_params = [{transform_indices = @transform_0, window_bounds = array<i64: 64, 128>}, {transform_indices = @transform_1, window_bounds = array<i64: 32, 128>}, {pipeline_mode = #tpu.pipeline_mode<synchronous>, transform_indices = @transform_2, window_bounds = array<i64: 1, 128>}, {pipeline_mode = #tpu.pipeline_mode<synchronous>, transform_indices = @transform_3, window_bounds = array<i64: 1, 128>}, {pipeline_mode = #tpu.pipeline_mode<synchronous>, transform_indices = @transform_4, window_bounds = array<i64: 8, 16>}, {pipeline_mode = #tpu.pipeline_mode<synchronous>, transform_indices = @transform_5, window_bounds = array<i64: 8, 8>}, {pipeline_mode = #tpu.pipeline_mode<synchronous>, transform_indices = @transform_6, window_bounds = array<i64: 8, 1>}, {pipeline_mode = #tpu.pipeline_mode<synchronous>, transform_indices = @transform_7, window_bounds = array<i64: 1, 128>}, {pipeline_mode = #tpu.pipeline_mode<synchronous>, transform_indices = @transform_8, window_bounds = array<i64: 1, 128>}, {pipeline_mode = #tpu.pipeline_mode<synchronous>, transform_indices = @transform_9, window_bounds = array<i64: 128, 256>}, {pipeline_mode = #tpu.pipeline_mode<synchronous>, transform_indices = @transform_10, window_bounds = array<i64: 1, 256>}, {pipeline_mode = #tpu.pipeline_mode<synchronous>, transform_indices = @transform_11, window_bounds = array<i64: 256, 128>}, {pipeline_mode = #tpu.pipeline_mode<synchronous>, transform_indices = @transform_12, window_bounds = array<i64: 1, 128>}, {transform_indices = @transform_13, window_bounds = array<i64: 32, 128>}]} {
    %c0 = arith.constant 0 : index
    %c0_0 = arith.constant 0 : index
    %0 = vector.load %arg1[%c0, %c0_0] : memref<64x128xbf16, #tpu.memory_space<vmem>>, vector<64x128xbf16>
    %1 = arith.extf %0 : vector<64x128xbf16> to vector<64x128xf32>
    %c0_1 = arith.constant 0 : index
    %c0_2 = arith.constant 0 : index
    %2 = vector.load %arg2[%c0_1, %c0_2] : memref<32x128xbf16, #tpu.memory_space<vmem>>, vector<32x128xbf16>
    %3 = arith.extf %2 : vector<32x128xbf16> to vector<32x128xf32>
    %c0_3 = arith.constant 0 : index
    %c0_4 = arith.constant 0 : index
    %4 = vector.load %arg3[%c0_3, %c0_4] : memref<1x128xf32, #tpu.memory_space<vmem>>, vector<1x128xf32>
    %c0_5 = arith.constant 0 : index
    %c0_6 = arith.constant 0 : index
    %5 = vector.load %arg4[%c0_5, %c0_6] : memref<1x128xf32, #tpu.memory_space<vmem>>, vector<1x128xf32>
    %cst = arith.constant dense<0.000000e+00> : vector<64xf32>
    %6 = vector.multi_reduction <add>, %1, %cst [1] : vector<64x128xf32> to vector<64xf32>
    %7 = vector.shape_cast %6 : vector<64xf32> to vector<64x1xf32>
    %cst_7 = arith.constant 1.280000e+02 : f32
    %8 = vector.broadcast %cst_7 : f32 to vector<64x1xf32>
    %9 = arith.divf %7, %8 : vector<64x1xf32>
    %10 = arith.mulf %1, %1 : vector<64x128xf32>
    %cst_8 = arith.constant dense<0.000000e+00> : vector<64xf32>
    %11 = vector.multi_reduction <add>, %10, %cst_8 [1] : vector<64x128xf32> to vector<64xf32>
    %12 = vector.shape_cast %11 : vector<64xf32> to vector<64x1xf32>
    %cst_9 = arith.constant 1.280000e+02 : f32
    %13 = vector.broadcast %cst_9 : f32 to vector<64x1xf32>
    %14 = arith.divf %12, %13 : vector<64x1xf32>
    %15 = arith.mulf %9, %9 : vector<64x1xf32>
    %16 = arith.subf %14, %15 : vector<64x1xf32>
    %cst_10 = arith.constant 0.000000e+00 : f32
    %17 = vector.broadcast %cst_10 : f32 to vector<64x1xf32>
    %18 = arith.maximumf %16, %17 : vector<64x1xf32>
    %19 = vector.broadcast %9 : vector<64x1xf32> to vector<64x128xf32>
    %20 = arith.subf %1, %19 : vector<64x128xf32>
    %cst_11 = arith.constant 9.99999974E-6 : f32
    %21 = vector.broadcast %cst_11 : f32 to vector<64x1xf32>
    %22 = arith.addf %18, %21 : vector<64x1xf32>
    %23 = math.rsqrt %22 : vector<64x1xf32>
    %24 = vector.broadcast %23 : vector<64x1xf32> to vector<64x128xf32>
    %25 = arith.mulf %20, %24 : vector<64x128xf32>
    %26 = vector.broadcast %4 : vector<1x128xf32> to vector<64x128xf32>
    %27 = arith.mulf %25, %26 : vector<64x128xf32>
    %28 = vector.broadcast %5 : vector<1x128xf32> to vector<64x128xf32>
    %29 = arith.addf %27, %28 : vector<64x128xf32>
    %c0_12 = arith.constant 0 : index
    %c0_13 = arith.constant 0 : index
    %30 = vector.load %arg3[%c0_12, %c0_13] : memref<1x128xf32, #tpu.memory_space<vmem>>, vector<1x128xf32>
    %c0_14 = arith.constant 0 : index
    %c0_15 = arith.constant 0 : index
    %31 = vector.load %arg4[%c0_14, %c0_15] : memref<1x128xf32, #tpu.memory_space<vmem>>, vector<1x128xf32>
    %cst_16 = arith.constant dense<0.000000e+00> : vector<32xf32>
    %32 = vector.multi_reduction <add>, %3, %cst_16 [1] : vector<32x128xf32> to vector<32xf32>
    %33 = vector.shape_cast %32 : vector<32xf32> to vector<32x1xf32>
    %cst_17 = arith.constant 1.280000e+02 : f32
    %34 = vector.broadcast %cst_17 : f32 to vector<32x1xf32>
    %35 = arith.divf %33, %34 : vector<32x1xf32>
    %36 = arith.mulf %3, %3 : vector<32x128xf32>
    %cst_18 = arith.constant dense<0.000000e+00> : vector<32xf32>
    %37 = vector.multi_reduction <add>, %36, %cst_18 [1] : vector<32x128xf32> to vector<32xf32>
    %38 = vector.shape_cast %37 : vector<32xf32> to vector<32x1xf32>
    %cst_19 = arith.constant 1.280000e+02 : f32
    %39 = vector.broadcast %cst_19 : f32 to vector<32x1xf32>
    %40 = arith.divf %38, %39 : vector<32x1xf32>
    %41 = arith.mulf %35, %35 : vector<32x1xf32>
    %42 = arith.subf %40, %41 : vector<32x1xf32>
    %cst_20 = arith.constant 0.000000e+00 : f32
    %43 = vector.broadcast %cst_20 : f32 to vector<32x1xf32>
    %44 = arith.maximumf %42, %43 : vector<32x1xf32>
    %45 = vector.broadcast %35 : vector<32x1xf32> to vector<32x128xf32>
    %46 = arith.subf %3, %45 : vector<32x128xf32>
    %cst_21 = arith.constant 9.99999974E-6 : f32
    %47 = vector.broadcast %cst_21 : f32 to vector<32x1xf32>
    %48 = arith.addf %44, %47 : vector<32x1xf32>
    %49 = math.rsqrt %48 : vector<32x1xf32>
    %50 = vector.broadcast %49 : vector<32x1xf32> to vector<32x128xf32>
    %51 = arith.mulf %46, %50 : vector<32x128xf32>
    %52 = vector.broadcast %30 : vector<1x128xf32> to vector<32x128xf32>
    %53 = arith.mulf %51, %52 : vector<32x128xf32>
    %54 = vector.broadcast %31 : vector<1x128xf32> to vector<32x128xf32>
    %55 = arith.addf %53, %54 : vector<32x128xf32>
    %56 = vector.shape_cast %29 : vector<64x128xf32> to vector<4x16x128xf32>
    %57 = arith.truncf %56 : vector<4x16x128xf32> to vector<4x16x128xbf16>
    %58 = vector.shape_cast %55 : vector<32x128xf32> to vector<4x8x128xf32>
    %59 = arith.truncf %58 : vector<4x8x128xf32> to vector<4x8x128xbf16>
    %c0_22 = arith.constant 0 : index
    %c0_23 = arith.constant 0 : index
    %60 = vector.load %arg5[%c0_22, %c0_23] : memref<8x16xbf16, #tpu.memory_space<vmem>>, vector<8x16xbf16>
    %61 = vector.shape_cast %60 : vector<8x16xbf16> to vector<1x8x16xbf16>
    %62 = vector.broadcast %61 : vector<1x8x16xbf16> to vector<4x8x16xbf16>
    %c0_24 = arith.constant 0 : index
    %c0_25 = arith.constant 0 : index
    %63 = vector.load %arg6[%c0_24, %c0_25] : memref<8x8xbf16, #tpu.memory_space<vmem>>, vector<8x8xbf16>
    %64 = vector.shape_cast %63 : vector<8x8xbf16> to vector<1x8x8xbf16>
    %65 = vector.broadcast %64 : vector<1x8x8xbf16> to vector<4x8x8xbf16>
    "tpu.trace_start"() <{level = 10 : i32, message = "bfw,bwd->bfd"}> : () -> ()
    %cst_26 = arith.constant dense<0.000000e+00> : vector<4x8x128xf32>
    %66 = tpu.matmul %62, %57, %cst_26 {dimension_numbers = #tpu.dot_dimension_numbers<[2], [1], [1], [2], [0, 0, 0, 1, 1, 2], [0], [0]>} : vector<4x8x16xbf16>, vector<4x16x128xbf16>, vector<4x8x128xf32> -> vector<4x8x128xf32>
    "tpu.trace_stop"() : () -> ()
    "tpu.trace_start"() <{level = 10 : i32, message = "bfh,bhd->bfd"}> : () -> ()
    %cst_27 = arith.constant dense<0.000000e+00> : vector<4x8x128xf32>
    %67 = tpu.matmul %65, %59, %cst_27 {dimension_numbers = #tpu.dot_dimension_numbers<[2], [1], [1], [2], [0, 0, 0, 1, 1, 2], [0], [0]>} : vector<4x8x8xbf16>, vector<4x8x128xbf16>, vector<4x8x128xf32> -> vector<4x8x128xf32>
    "tpu.trace_stop"() : () -> ()
    %68 = arith.addf %66, %67 : vector<4x8x128xf32>
    %c0_28 = arith.constant 0 : index
    %c0_29 = arith.constant 0 : index
    %69 = vector.load %arg7[%c0_28, %c0_29] : memref<8x1xf32, #tpu.memory_space<vmem>>, vector<8x1xf32>
    %70 = vector.shape_cast %69 : vector<8x1xf32> to vector<1x8x1xf32>
    %71 = vector.broadcast %70 : vector<1x8x1xf32> to vector<4x8x128xf32>
    %72 = arith.addf %68, %71 : vector<4x8x128xf32>
    %cst_30 = arith.constant 0.000000e+00 : f32
    %73 = vector.broadcast %cst_30 : f32 to vector<4x8x128xf32>
    %74 = arith.maximumf %72, %73 : vector<4x8x128xf32>
    %75 = vector.shape_cast %74 : vector<4x8x128xf32> to vector<32x128xf32>
    %76 = arith.addf %75, %3 : vector<32x128xf32>
    %c0_31 = arith.constant 0 : index
    %c0_32 = arith.constant 0 : index
    %77 = vector.load %arg8[%c0_31, %c0_32] : memref<1x128xf32, #tpu.memory_space<vmem>>, vector<1x128xf32>
    %c0_33 = arith.constant 0 : index
    %c0_34 = arith.constant 0 : index
    %78 = vector.load %arg9[%c0_33, %c0_34] : memref<1x128xf32, #tpu.memory_space<vmem>>, vector<1x128xf32>
    %cst_35 = arith.constant dense<0.000000e+00> : vector<32xf32>
    %79 = vector.multi_reduction <add>, %76, %cst_35 [1] : vector<32x128xf32> to vector<32xf32>
    %80 = vector.shape_cast %79 : vector<32xf32> to vector<32x1xf32>
    %cst_36 = arith.constant 1.280000e+02 : f32
    %81 = vector.broadcast %cst_36 : f32 to vector<32x1xf32>
    %82 = arith.divf %80, %81 : vector<32x1xf32>
    %83 = arith.mulf %76, %76 : vector<32x128xf32>
    %cst_37 = arith.constant dense<0.000000e+00> : vector<32xf32>
    %84 = vector.multi_reduction <add>, %83, %cst_37 [1] : vector<32x128xf32> to vector<32xf32>
    %85 = vector.shape_cast %84 : vector<32xf32> to vector<32x1xf32>
    %cst_38 = arith.constant 1.280000e+02 : f32
    %86 = vector.broadcast %cst_38 : f32 to vector<32x1xf32>
    %87 = arith.divf %85, %86 : vector<32x1xf32>
    %88 = arith.mulf %82, %82 : vector<32x1xf32>
    %89 = arith.subf %87, %88 : vector<32x1xf32>
    %cst_39 = arith.constant 0.000000e+00 : f32
    %90 = vector.broadcast %cst_39 : f32 to vector<32x1xf32>
    %91 = arith.maximumf %89, %90 : vector<32x1xf32>
    %92 = vector.broadcast %82 : vector<32x1xf32> to vector<32x128xf32>
    %93 = arith.subf %76, %92 : vector<32x128xf32>
    %cst_40 = arith.constant 9.99999974E-6 : f32
    %94 = vector.broadcast %cst_40 : f32 to vector<32x1xf32>
    %95 = arith.addf %91, %94 : vector<32x1xf32>
    %96 = math.rsqrt %95 : vector<32x1xf32>
    %97 = vector.broadcast %96 : vector<32x1xf32> to vector<32x128xf32>
    %98 = arith.mulf %93, %97 : vector<32x128xf32>
    %99 = vector.broadcast %77 : vector<1x128xf32> to vector<32x128xf32>
    %100 = arith.mulf %98, %99 : vector<32x128xf32>
    %101 = vector.broadcast %78 : vector<1x128xf32> to vector<32x128xf32>
    %102 = arith.addf %100, %101 : vector<32x128xf32>
    %103 = arith.truncf %102 : vector<32x128xf32> to vector<32x128xbf16>
    %c0_41 = arith.constant 0 : index
    %c0_42 = arith.constant 0 : index
    %104 = vector.load %arg10[%c0_41, %c0_42] : memref<128x256xbf16, #tpu.memory_space<vmem>>, vector<128x256xbf16>
    %cst_43 = arith.constant dense<0.000000e+00> : vector<32x256xf32>
    %105 = tpu.matmul %103, %104, %cst_43 {dimension_numbers = #tpu.dot_dimension_numbers<[1], [0], [0], [1], [0, 0, 1, 1], [], []>} : vector<32x128xbf16>, vector<128x256xbf16>, vector<32x256xf32> -> vector<32x256xf32>
    %c0_44 = arith.constant 0 : index
    %c0_45 = arith.constant 0 : index
    %106 = vector.load %arg11[%c0_44, %c0_45] : memref<1x256xf32, #tpu.memory_space<vmem>>, vector<1x256xf32>
    %107 = vector.broadcast %106 : vector<1x256xf32> to vector<32x256xf32>
    %108 = arith.addf %105, %107 : vector<32x256xf32>
    %cst_46 = arith.constant 0.000000e+00 : f32
    %109 = vector.broadcast %cst_46 : f32 to vector<32x256xf32>
    %110 = arith.maximumf %108, %109 : vector<32x256xf32>
    %111 = arith.truncf %110 : vector<32x256xf32> to vector<32x256xbf16>
    %c0_47 = arith.constant 0 : index
    %c0_48 = arith.constant 0 : index
    %112 = vector.load %arg12[%c0_47, %c0_48] : memref<256x128xbf16, #tpu.memory_space<vmem>>, vector<256x128xbf16>
    %cst_49 = arith.constant dense<0.000000e+00> : vector<32x128xf32>
    %113 = tpu.matmul %111, %112, %cst_49 {dimension_numbers = #tpu.dot_dimension_numbers<[1], [0], [0], [1], [0, 0, 1, 1], [], []>} : vector<32x256xbf16>, vector<256x128xbf16>, vector<32x128xf32> -> vector<32x128xf32>
    %c0_50 = arith.constant 0 : index
    %c0_51 = arith.constant 0 : index
    %114 = vector.load %arg13[%c0_50, %c0_51] : memref<1x128xf32, #tpu.memory_space<vmem>>, vector<1x128xf32>
    %115 = vector.broadcast %114 : vector<1x128xf32> to vector<32x128xf32>
    %116 = arith.addf %113, %115 : vector<32x128xf32>
    %117 = arith.addf %116, %76 : vector<32x128xf32>
    %118 = arith.truncf %117 : vector<32x128xf32> to vector<32x128xbf16>
    %c0_52 = arith.constant 0 : index
    %c0_53 = arith.constant 0 : index
    %119 = vector.load %arg14[%c0_52, %c0_53] : memref<32x128xbf16, #tpu.memory_space<vmem>>, vector<32x128xbf16>
    tpu.vector_store %arg14[%c0_52, %c0_53], %118 {strides = array<i32>} : memref<32x128xbf16, #tpu.memory_space<vmem>>, vector<32x128xbf16>,
    return
  }
  func.func @transform_0(%arg0: i32) -> (i32, i32) {
    %c0_i32 = arith.constant 0 : i32
    %c0_i32_0 = arith.constant 0 : i32
    return %arg0, %c0_i32 : i32, i32
  }
  func.func @transform_1(%arg0: i32) -> (i32, i32) {
    %c0_i32 = arith.constant 0 : i32
    %c0_i32_0 = arith.constant 0 : i32
    return %arg0, %c0_i32 : i32, i32
  }
  func.func @transform_2(%arg0: i32) -> (i32, i32) {
    %c0_i32 = arith.constant 0 : i32
    %c0_i32_0 = arith.constant 0 : i32
    %c0_i32_1 = arith.constant 0 : i32
    return %c0_i32, %c0_i32_0 : i32, i32
  }
  func.func @transform_3(%arg0: i32) -> (i32, i32) {
    %c0_i32 = arith.constant 0 : i32
    %c0_i32_0 = arith.constant 0 : i32
    %c0_i32_1 = arith.constant 0 : i32
    return %c0_i32, %c0_i32_0 : i32, i32
  }
  func.func @transform_4(%arg0: i32) -> (i32, i32) {
    %c0_i32 = arith.constant 0 : i32
    %c0_i32_0 = arith.constant 0 : i32
    %c0_i32_1 = arith.constant 0 : i32
    return %c0_i32, %c0_i32_0 : i32, i32
  }
  func.func @transform_5(%arg0: i32) -> (i32, i32) {
    %c0_i32 = arith.constant 0 : i32
    %c0_i32_0 = arith.constant 0 : i32
    %c0_i32_1 = arith.constant 0 : i32
    return %c0_i32, %c0_i32_0 : i32, i32
  }
  func.func @transform_6(%arg0: i32) -> (i32, i32) {
    %c0_i32 = arith.constant 0 : i32
    %c0_i32_0 = arith.constant 0 : i32
    %c0_i32_1 = arith.constant 0 : i32
    return %c0_i32, %c0_i32_0 : i32, i32
  }
  func.func @transform_7(%arg0: i32) -> (i32, i32) {
    %c0_i32 = arith.constant 0 : i32
    %c0_i32_0 = arith.constant 0 : i32
    %c0_i32_1 = arith.constant 0 : i32
    return %c0_i32, %c0_i32_0 : i32, i32
  }
  func.func @transform_8(%arg0: i32) -> (i32, i32) {
    %c0_i32 = arith.constant 0 : i32
    %c0_i32_0 = arith.constant 0 : i32
    %c0_i32_1 = arith.constant 0 : i32
    return %c0_i32, %c0_i32_0 : i32, i32
  }
  func.func @transform_9(%arg0: i32) -> (i32, i32) {
    %c0_i32 = arith.constant 0 : i32
    %c0_i32_0 = arith.constant 0 : i32
    %c0_i32_1 = arith.constant 0 : i32
    return %c0_i32, %c0_i32_0 : i32, i32
  }
  func.func @transform_10(%arg0: i32) -> (i32, i32) {
    %c0_i32 = arith.constant 0 : i32
    %c0_i32_0 = arith.constant 0 : i32
    %c0_i32_1 = arith.constant 0 : i32
    return %c0_i32, %c0_i32_0 : i32, i32
  }
  func.func @transform_11(%arg0: i32) -> (i32, i32) {
    %c0_i32 = arith.constant 0 : i32
    %c0_i32_0 = arith.constant 0 : i32
    %c0_i32_1 = arith.constant 0 : i32
    return %c0_i32, %c0_i32_0 : i32, i32
  }
  func.func @transform_12(%arg0: i32) -> (i32, i32) {
    %c0_i32 = arith.constant 0 : i32
    %c0_i32_0 = arith.constant 0 : i32
    %c0_i32_1 = arith.constant 0 : i32
    return %c0_i32, %c0_i32_0 : i32, i32
  }
  func.func @transform_13(%arg0: i32) -> (i32, i32) {
    %c0_i32 = arith.constant 0 : i32
    %c0_i32_0 = arith.constant 0 : i32
    return %arg0, %c0_i32 : i32, i32
  }
}

module attributes {stable_mosaic.version = 11 : i64} {
  func.func @_mlpmix_decoder_kernel(%arg0: i32, %arg1: memref<64x128xbf16, #tpu.memory_space<vmem>>, %arg2: memref<32x128xbf16, #tpu.memory_space<vmem>>, %arg3: memref<1x128xf32, #tpu.memory_space<vmem>>, %arg4: memref<1x128xf32, #tpu.memory_space<vmem>>, %arg5: memref<8x16xbf16, #tpu.memory_space<vmem>>, %arg6: memref<8x8xbf16, #tpu.memory_space<vmem>>, %arg7: memref<8x1xf32, #tpu.memory_space<vmem>>, %arg8: memref<1x128xf32, #tpu.memory_space<vmem>>, %arg9: memref<1x128xf32, #tpu.memory_space<vmem>>, %arg10: memref<128x256xbf16, #tpu.memory_space<vmem>>, %arg11: memref<1x256xf32, #tpu.memory_space<vmem>>, %arg12: memref<256x128xbf16, #tpu.memory_space<vmem>>, %arg13: memref<1x128xf32, #tpu.memory_space<vmem>>, %arg14: memref<32x128xbf16, #tpu.memory_space<vmem>>) attributes {dimension_semantics = [#tpu.dimension_semantics<parallel>], iteration_bounds = array<i64: 1>, scalar_prefetch = 0 : i64, scratch_operands = 0 : i64, tpu.core_type = #tpu.core_type<tc>, window_params = [{transform_indices = @transform_0, window_bounds = array<i64: 64, 128>}, {transform_indices = @transform_1, window_bounds = array<i64: 32, 128>}, {pipeline_mode = #tpu.pipeline_mode<synchronous>, transform_indices = @transform_2, window_bounds = array<i64: 1, 128>}, {pipeline_mode = #tpu.pipeline_mode<synchronous>, transform_indices = @transform_3, window_bounds = array<i64: 1, 128>}, {pipeline_mode = #tpu.pipeline_mode<synchronous>, transform_indices = @transform_4, window_bounds = array<i64: 8, 16>}, {pipeline_mode = #tpu.pipeline_mode<synchronous>, transform_indices = @transform_5, window_bounds = array<i64: 8, 8>}, {pipeline_mode = #tpu.pipeline_mode<synchronous>, transform_indices = @transform_6, window_bounds = array<i64: 8, 1>}, {pipeline_mode = #tpu.pipeline_mode<synchronous>, transform_indices = @transform_7, window_bounds = array<i64: 1, 128>}, {pipeline_mode = #tpu.pipeline_mode<synchronous>, transform_indices = @transform_8, window_bounds = array<i64: 1, 128>}, {pipeline_mode = #tpu.pipeline_mode<synchronous>, transform_indices = @transform_9, window_bounds = array<i64: 128, 256>}, {pipeline_mode = #tpu.pipeline_mode<synchronous>, transform_indices = @transform_10, window_bounds = array<i64: 1, 256>}, {pipeline_mode = #tpu.pipeline_mode<synchronous>, transform_indices = @transform_11, window_bounds = array<i64: 256, 128>}, {pipeline_mode = #tpu.pipeline_mode<synchronous>, transform_indices = @transform_12, window_bounds = array<i64: 1, 128>}, {transform_indices = @transform_13, window_bounds = array<i64: 32, 128>}]} {
    %c0 = arith.constant 0 : index
    %c0_0 = arith.constant 0 : index
    %0 = vector.load %arg1[%c0, %c0_0] : memref<64x128xbf16, #tpu.memory_space<vmem>>, vector<64x128xbf16>
    %1 = arith.extf %0 : vector<64x128xbf16> to vector<64x128xf32>
    %c0_1 = arith.constant 0 : index
    %c0_2 = arith.constant 0 : index
    %2 = vector.load %arg2[%c0_1, %c0_2] : memref<32x128xbf16, #tpu.memory_space<vmem>>, vector<32x128xbf16>
    %3 = arith.extf %2 : vector<32x128xbf16> to vector<32x128xf32>
    %c0_3 = arith.constant 0 : index
    %c0_4 = arith.constant 0 : index
    %4 = vector.load %arg3[%c0_3, %c0_4] : memref<1x128xf32, #tpu.memory_space<vmem>>, vector<1x128xf32>
    %c0_5 = arith.constant 0 : index
    %c0_6 = arith.constant 0 : index
    %5 = vector.load %arg4[%c0_5, %c0_6] : memref<1x128xf32, #tpu.memory_space<vmem>>, vector<1x128xf32>
    %cst = arith.constant dense<0.000000e+00> : vector<64xf32>
    %6 = vector.multi_reduction <add>, %1, %cst [1] : vector<64x128xf32> to vector<64xf32>
    %7 = vector.shape_cast %6 : vector<64xf32> to vector<64x1xf32>
    %cst_7 = arith.constant 1.280000e+02 : f32
    %8 = vector.broadcast %cst_7 : f32 to vector<64x1xf32>
    %9 = arith.divf %7, %8 : vector<64x1xf32>
    %10 = arith.mulf %1, %1 : vector<64x128xf32>
    %cst_8 = arith.constant dense<0.000000e+00> : vector<64xf32>
    %11 = vector.multi_reduction <add>, %10, %cst_8 [1] : vector<64x128xf32> to vector<64xf32>
    %12 = vector.shape_cast %11 : vector<64xf32> to vector<64x1xf32>
    %cst_9 = arith.constant 1.280000e+02 : f32
    %13 = vector.broadcast %cst_9 : f32 to vector<64x1xf32>
    %14 = arith.divf %12, %13 : vector<64x1xf32>
    %15 = arith.mulf %9, %9 : vector<64x1xf32>
    %16 = arith.subf %14, %15 : vector<64x1xf32>
    %cst_10 = arith.constant 0.000000e+00 : f32
    %17 = vector.broadcast %cst_10 : f32 to vector<64x1xf32>
    %18 = arith.maximumf %16, %17 : vector<64x1xf32>
    %19 = vector.broadcast %9 : vector<64x1xf32> to vector<64x128xf32>
    %20 = arith.subf %1, %19 : vector<64x128xf32>
    %cst_11 = arith.constant 9.99999974E-6 : f32
    %21 = vector.broadcast %cst_11 : f32 to vector<64x1xf32>
    %22 = arith.addf %18, %21 : vector<64x1xf32>
    %23 = math.rsqrt %22 : vector<64x1xf32>
    %24 = vector.broadcast %23 : vector<64x1xf32> to vector<64x128xf32>
    %25 = arith.mulf %20, %24 : vector<64x128xf32>
    %26 = vector.broadcast %4 : vector<1x128xf32> to vector<64x128xf32>
    %27 = arith.mulf %25, %26 : vector<64x128xf32>
    %28 = vector.broadcast %5 : vector<1x128xf32> to vector<64x128xf32>
    %29 = arith.addf %27, %28 : vector<64x128xf32>
    %c0_12 = arith.constant 0 : index
    %c0_13 = arith.constant 0 : index
    %30 = vector.load %arg3[%c0_12, %c0_13] : memref<1x128xf32, #tpu.memory_space<vmem>>, vector<1x128xf32>
    %c0_14 = arith.constant 0 : index
    %c0_15 = arith.constant 0 : index
    %31 = vector.load %arg4[%c0_14, %c0_15] : memref<1x128xf32, #tpu.memory_space<vmem>>, vector<1x128xf32>
    %cst_16 = arith.constant dense<0.000000e+00> : vector<32xf32>
    %32 = vector.multi_reduction <add>, %3, %cst_16 [1] : vector<32x128xf32> to vector<32xf32>
    %33 = vector.shape_cast %32 : vector<32xf32> to vector<32x1xf32>
    %cst_17 = arith.constant 1.280000e+02 : f32
    %34 = vector.broadcast %cst_17 : f32 to vector<32x1xf32>
    %35 = arith.divf %33, %34 : vector<32x1xf32>
    %36 = arith.mulf %3, %3 : vector<32x128xf32>
    %cst_18 = arith.constant dense<0.000000e+00> : vector<32xf32>
    %37 = vector.multi_reduction <add>, %36, %cst_18 [1] : vector<32x128xf32> to vector<32xf32>
    %38 = vector.shape_cast %37 : vector<32xf32> to vector<32x1xf32>
    %cst_19 = arith.constant 1.280000e+02 : f32
    %39 = vector.broadcast %cst_19 : f32 to vector<32x1xf32>
    %40 = arith.divf %38, %39 : vector<32x1xf32>
    %41 = arith.mulf %35, %35 : vector<32x1xf32>
    %42 = arith.subf %40, %41 : vector<32x1xf32>
    %cst_20 = arith.constant 0.000000e+00 : f32
    %43 = vector.broadcast %cst_20 : f32 to vector<32x1xf32>
    %44 = arith.maximumf %42, %43 : vector<32x1xf32>
    %45 = vector.broadcast %35 : vector<32x1xf32> to vector<32x128xf32>
    %46 = arith.subf %3, %45 : vector<32x128xf32>
    %cst_21 = arith.constant 9.99999974E-6 : f32
    %47 = vector.broadcast %cst_21 : f32 to vector<32x1xf32>
    %48 = arith.addf %44, %47 : vector<32x1xf32>
    %49 = math.rsqrt %48 : vector<32x1xf32>
    %50 = vector.broadcast %49 : vector<32x1xf32> to vector<32x128xf32>
    %51 = arith.mulf %46, %50 : vector<32x128xf32>
    %52 = vector.broadcast %30 : vector<1x128xf32> to vector<32x128xf32>
    %53 = arith.mulf %51, %52 : vector<32x128xf32>
    %54 = vector.broadcast %31 : vector<1x128xf32> to vector<32x128xf32>
    %55 = arith.addf %53, %54 : vector<32x128xf32>
    %56 = vector.shape_cast %29 : vector<64x128xf32> to vector<4x16x128xf32>
    %57 = arith.truncf %56 : vector<4x16x128xf32> to vector<4x16x128xbf16>
    %58 = vector.shape_cast %55 : vector<32x128xf32> to vector<4x8x128xf32>
    %59 = arith.truncf %58 : vector<4x8x128xf32> to vector<4x8x128xbf16>
    %c0_22 = arith.constant 0 : index
    %c0_23 = arith.constant 0 : index
    %60 = vector.load %arg5[%c0_22, %c0_23] : memref<8x16xbf16, #tpu.memory_space<vmem>>, vector<8x16xbf16>
    %61 = vector.shape_cast %60 : vector<8x16xbf16> to vector<1x8x16xbf16>
    %62 = vector.broadcast %61 : vector<1x8x16xbf16> to vector<4x8x16xbf16>
    %c0_24 = arith.constant 0 : index
    %c0_25 = arith.constant 0 : index
    %63 = vector.load %arg6[%c0_24, %c0_25] : memref<8x8xbf16, #tpu.memory_space<vmem>>, vector<8x8xbf16>
    %64 = vector.shape_cast %63 : vector<8x8xbf16> to vector<1x8x8xbf16>
    %65 = vector.broadcast %64 : vector<1x8x8xbf16> to vector<4x8x8xbf16>
    "tpu.trace_start"() <{level = 10 : i32, message = "bfw,bwd->bfd"}> : () -> ()
    %cst_26 = arith.constant dense<0.000000e+00> : vector<4x8x128xf32>
    %66 = tpu.matmul %62, %57, %cst_26 {dimension_numbers = #tpu.dot_dimension_numbers<[2], [1], [1], [2], [0, 0, 0, 1, 1, 2], [0], [0]>} : vector<4x8x16xbf16>, vector<4x16x128xbf16>, vector<4x8x128xf32> -> vector<4x8x128xf32>
    "tpu.trace_stop"() : () -> ()
    "tpu.trace_start"() <{level = 10 : i32, message = "bfh,bhd->bfd"}> : () -> ()
    %cst_27 = arith.constant dense<0.000000e+00> : vector<4x8x128xf32>
    %67 = tpu.matmul %65, %59, %cst_27 {dimension_numbers = #tpu.dot_dimension_numbers<[2], [1], [1], [2], [0, 0, 0, 1, 1, 2], [0], [0]>} : vector<4x8x8xbf16>, vector<4x8x128xbf16>, vector<4x8x128xf32> -> vector<4x8x128xf32>
    "tpu.trace_stop"() : () -> ()
    %68 = arith.addf %66, %67 : vector<4x8x128xf32>
    %c0_28 = arith.constant 0 : index
    %c0_29 = arith.constant 0 : index
    %69 = vector.load %arg7[%c0_28, %c0_29] : memref<8x1xf32, #tpu.memory_space<vmem>>, vector<8x1xf32>
    %70 = vector.shape_cast %69 : vector<8x1xf32> to vector<1x8x1xf32>
    %71 = vector.broadcast %70 : vector<1x8x1xf32> to vector<4x8x128xf32>
    %72 = arith.addf %68, %71 : vector<4x8x128xf32>
    %cst_30 = arith.constant 0.000000e+00 : f32
    %73 = vector.broadcast %cst_30 : f32 to vector<4x8x128xf32>
    %74 = arith.maximumf %72, %73 : vector<4x8x128xf32>
    %75 = vector.shape_cast %74 : vector<4x8x128xf32> to vector<32x128xf32>
    %76 = arith.addf %75, %3 : vector<32x128xf32>
    %c0_31 = arith.constant 0 : index
    %c0_32 = arith.constant 0 : index
    %77 = vector.load %arg8[%c0_31, %c0_32] : memref<1x128xf32, #tpu.memory_space<vmem>>, vector<1x128xf32>
    %c0_33 = arith.constant 0 : index
    %c0_34 = arith.constant 0 : index
    %78 = vector.load %arg9[%c0_33, %c0_34] : memref<1x128xf32, #tpu.memory_space<vmem>>, vector<1x128xf32>
    %cst_35 = arith.constant dense<0.000000e+00> : vector<32xf32>
    %79 = vector.multi_reduction <add>, %76, %cst_35 [1] : vector<32x128xf32> to vector<32xf32>
    %80 = vector.shape_cast %79 : vector<32xf32> to vector<32x1xf32>
    %cst_36 = arith.constant 1.280000e+02 : f32
    %81 = vector.broadcast %cst_36 : f32 to vector<32x1xf32>
    %82 = arith.divf %80, %81 : vector<32x1xf32>
    %83 = arith.mulf %76, %76 : vector<32x128xf32>
    %cst_37 = arith.constant dense<0.000000e+00> : vector<32xf32>
    %84 = vector.multi_reduction <add>, %83, %cst_37 [1] : vector<32x128xf32> to vector<32xf32>
    %85 = vector.shape_cast %84 : vector<32xf32> to vector<32x1xf32>
    %cst_38 = arith.constant 1.280000e+02 : f32
    %86 = vector.broadcast %cst_38 : f32 to vector<32x1xf32>
    %87 = arith.divf %85, %86 : vector<32x1xf32>
    %88 = arith.mulf %82, %82 : vector<32x1xf32>
    %89 = arith.subf %87, %88 : vector<32x1xf32>
    %cst_39 = arith.constant 0.000000e+00 : f32
    %90 = vector.broadcast %cst_39 : f32 to vector<32x1xf32>
    %91 = arith.maximumf %89, %90 : vector<32x1xf32>
    %92 = vector.broadcast %82 : vector<32x1xf32> to vector<32x128xf32>
    %93 = arith.subf %76, %92 : vector<32x128xf32>
    %cst_40 = arith.constant 9.99999974E-6 : f32
    %94 = vector.broadcast %cst_40 : f32 to vector<32x1xf32>
    %95 = arith.addf %91, %94 : vector<32x1xf32>
    %96 = math.rsqrt %95 : vector<32x1xf32>
    %97 = vector.broadcast %96 : vector<32x1xf32> to vector<32x128xf32>
    %98 = arith.mulf %93, %97 : vector<32x128xf32>
    %99 = vector.broadcast %77 : vector<1x128xf32> to vector<32x128xf32>
    %100 = arith.mulf %98, %99 : vector<32x128xf32>
    %101 = vector.broadcast %78 : vector<1x128xf32> to vector<32x128xf32>
    %102 = arith.addf %100, %101 : vector<32x128xf32>
    %103 = arith.truncf %102 : vector<32x128xf32> to vector<32x128xbf16>
    %c0_41 = arith.constant 0 : index
    %c0_42 = arith.constant 0 : index
    %104 = vector.load %arg10[%c0_41, %c0_42] : memref<128x256xbf16, #tpu.memory_space<vmem>>, vector<128x256xbf16>
    %cst_43 = arith.constant dense<0.000000e+00> : vector<32x256xf32>
    %105 = tpu.matmul %103, %104, %cst_43 {dimension_numbers = #tpu.dot_dimension_numbers<[1], [0], [0], [1], [0, 0, 1, 1], [], []>} : vector<32x128xbf16>, vector<128x256xbf16>, vector<32x256xf32> -> vector<32x256xf32>
    %c0_44 = arith.constant 0 : index
    %c0_45 = arith.constant 0 : index
    %106 = vector.load %arg11[%c0_44, %c0_45] : memref<1x256xf32, #tpu.memory_space<vmem>>, vector<1x256xf32>
    %107 = vector.broadcast %106 : vector<1x256xf32> to vector<32x256xf32>
    %108 = arith.addf %105, %107 : vector<32x256xf32>
    %cst_46 = arith.constant 0.000000e+00 : f32
    %109 = vector.broadcast %cst_46 : f32 to vector<32x256xf32>
    %110 = arith.maximumf %108, %109 : vector<32x256xf32>
    %111 = arith.truncf %110 : vector<32x256xf32> to vector<32x256xbf16>
    %c0_47 = arith.constant 0 : index
    %c0_48 = arith.constant 0 : index
    %112 = vector.load %arg12[%c0_47, %c0_48] : memref<256x128xbf16, #tpu.memory_space<vmem>>, vector<256x128xbf16>
    %cst_49 = arith.constant dense<0.000000e+00> : vector<32x128xf32>
    %113 = tpu.matmul %111, %112, %cst_49 {dimension_numbers = #tpu.dot_dimension_numbers<[1], [0], [0], [1], [0, 0, 1, 1], [], []>} : vector<32x256xbf16>, vector<256x128xbf16>, vector<32x128xf32> -> vector<32x128xf32>
    %c0_50 = arith.constant 0 : index
    %c0_51 = arith.constant 0 : index
    %114 = vector.load %arg13[%c0_50, %c0_51] : memref<1x128xf32, #tpu.memory_space<vmem>>, vector<1x128xf32>
    %115 = vector.broadcast %114 : vector<1x128xf32> to vector<32x128xf32>
    %116 = arith.addf %113, %115 : vector<32x128xf32>
    %117 = arith.addf %116, %76 : vector<32x128xf32>
    %118 = arith.truncf %117 : vector<32x128xf32> to vector<32x128xbf16>
    %c0_52 = arith.constant 0 : index
    %c0_53 = arith.constant 0 : index
    %119 = vector.load %arg14[%c0_52, %c0_53] : memref<32x128xbf16, #tpu.memory_space<vmem>>, vector<32x128xbf16>
    tpu.vector_store %arg14[%c0_52, %c0_53], %118 {strides = array<i32>} : memref<32x128xbf16, #tpu.memory_space<vmem>>, vector<32x128xbf16>,
    return
  }
  func.func @transform_0(%arg0: i32) -> (i32, i32) {
    %c0_i32 = arith.constant 0 : i32
    %c0_i32_0 = arith.constant 0 : i32
    return %arg0, %c0_i32 : i32, i32
  }
  func.func @transform_1(%arg0: i32) -> (i32, i32) {
    %c0_i32 = arith.constant 0 : i32
    %c0_i32_0 = arith.constant 0 : i32
    return %arg0, %c0_i32 : i32, i32
  }
  func.func @transform_2(%arg0: i32) -> (i32, i32) {
    %c0_i32 = arith.constant 0 : i32
    %c0_i32_0 = arith.constant 0 : i32
    %c0_i32_1 = arith.constant 0 : i32
    return %c0_i32, %c0_i32_0 : i32, i32
  }
  func.func @transform_3(%arg0: i32) -> (i32, i32) {
    %c0_i32 = arith.constant 0 : i32
    %c0_i32_0 = arith.constant 0 : i32
    %c0_i32_1 = arith.constant 0 : i32
    return %c0_i32, %c0_i32_0 : i32, i32
  }
  func.func @transform_4(%arg0: i32) -> (i32, i32) {
    %c0_i32 = arith.constant 0 : i32
    %c0_i32_0 = arith.constant 0 : i32
    %c0_i32_1 = arith.constant 0 : i32
    return %c0_i32, %c0_i32_0 : i32, i32
  }
  func.func @transform_5(%arg0: i32) -> (i32, i32) {
    %c0_i32 = arith.constant 0 : i32
    %c0_i32_0 = arith.constant 0 : i32
    %c0_i32_1 = arith.constant 0 : i32
    return %c0_i32, %c0_i32_0 : i32, i32
  }
  func.func @transform_6(%arg0: i32) -> (i32, i32) {
    %c0_i32 = arith.constant 0 : i32
    %c0_i32_0 = arith.constant 0 : i32
    %c0_i32_1 = arith.constant 0 : i32
    return %c0_i32, %c0_i32_0 : i32, i32
  }
  func.func @transform_7(%arg0: i32) -> (i32, i32) {
    %c0_i32 = arith.constant 0 : i32
    %c0_i32_0 = arith.constant 0 : i32
    %c0_i32_1 = arith.constant 0 : i32
    return %c0_i32, %c0_i32_0 : i32, i32
  }
  func.func @transform_8(%arg0: i32) -> (i32, i32) {
    %c0_i32 = arith.constant 0 : i32
    %c0_i32_0 = arith.constant 0 : i32
    %c0_i32_1 = arith.constant 0 : i32
    return %c0_i32, %c0_i32_0 : i32, i32
  }
  func.func @transform_9(%arg0: i32) -> (i32, i32) {
    %c0_i32 = arith.constant 0 : i32
    %c0_i32_0 = arith.constant 0 : i32
    %c0_i32_1 = arith.constant 0 : i32
    return %c0_i32, %c0_i32_0 : i32, i32
  }
  func.func @transform_10(%arg0: i32) -> (i32, i32) {
    %c0_i32 = arith.constant 0 : i32
    %c0_i32_0 = arith.constant 0 : i32
    %c0_i32_1 = arith.constant 0 : i32
    return %c0_i32, %c0_i32_0 : i32, i32
  }
  func.func @transform_11(%arg0: i32) -> (i32, i32) {
    %c0_i32 = arith.constant 0 : i32
    %c0_i32_0 = arith.constant 0 : i32
    %c0_i32_1 = arith.constant 0 : i32
    return %c0_i32, %c0_i32_0 : i32, i32
  }
  func.func @transform_12(%arg0: i32) -> (i32, i32) {
    %c0_i32 = arith.constant 0 : i32
    %c0_i32_0 = arith.constant 0 : i32
    %c0_i32_1 = arith.constant 0 : i32
    return %c0_i32, %c0_i32_0 : i32, i32
  }
  func.func @transform_13(%arg0: i32) -> (i32, i32) {
    %c0_i32 = arith.constant 0 : i32
    %c0_i32_0 = arith.constant 0 : i32
    return %arg0, %c0_i32 : i32, i32
  }
}

</mosaic_0001>

<llo_original>
// kernel: tpu_custom_call.1
$region0: #{tpu_custom_call.1}
  #allocation0 [shape = 'u32[]', space=smem, size = 0x4, offset = 0x4, fixed_abs, tag = 'smem constant byte address 0x4 - core index']
  #allocation1 [shape = 'u32[72,128]{1,0:T(1,128)}', space=vmem, size = 0x9000, scoped, tag = 'internal scratch']
  %s0 = inlined_call_operand.hbm [shape: bf16[64,128], index: 0, kind: input, shape index: {}]
  %s1 = inlined_call_operand.hbm [shape: bf16[32,128], index: 1, kind: input, shape index: {}]
  %s2 = inlined_call_operand.hbm [shape: f32[1,128], index: 2, kind: input, shape index: {}]
  %s3 = inlined_call_operand.hbm [shape: f32[1,128], index: 3, kind: input, shape index: {}]
  %s4 = inlined_call_operand.vmem [shape: bf16[8,16], index: 4, kind: input, shape index: {}]
  %s5 = inlined_call_operand.vmem [shape: bf16[8,8], index: 5, kind: input, shape index: {}]
  %s6 = inlined_call_operand.vmem [shape: f32[8,1], index: 6, kind: input, shape index: {}]
  %s7 = inlined_call_operand.vmem [shape: f32[1,128], index: 7, kind: input, shape index: {}]
  %s8 = inlined_call_operand.vmem [shape: f32[1,128], index: 8, kind: input, shape index: {}]
  %s9 = inlined_call_operand.hbm [shape: bf16[128,256], index: 9, kind: input, shape index: {}]
  %s10 = inlined_call_operand.vmem [shape: f32[1,256], index: 10, kind: input, shape index: {}]
  %s11 = inlined_call_operand.hbm [shape: bf16[256,128], index: 11, kind: input, shape index: {}]
  %s12 = inlined_call_operand.vmem [shape: f32[1,128], index: 12, kind: input, shape index: {}]
  %s13 = inlined_call_operand.hbm [shape: bf16[32,128], index: 13, kind: output, shape index: {}]
  %s14 = sld [smem:[#allocation0]]
  $region86: #{tpu_custom_call.1} parent=0
    _
  %s16 = ssub.s32 1, %s14
  %s17 = scalar_select 0, %s16, %s14
  $region1: #{tpu_custom_call.1} parent=0
    #allocation2 [shape = 'u8[16384]{0}', space=vmem, size = 0x4000, scoped, tag = 'input window, operand 0, single buffered']
    #allocation3 [shape = 's32[1]{0}', space=sflag, size = 0x4, scoped, tag = 'scoped memory for tpu_custom_call.1']
    #allocation4 [shape = 's32[1]{0}', space=sflag, size = 0x4, scoped, tag = 'scoped memory for tpu_custom_call.1']
    #allocation5 [shape = 'u8[8192]{0}', space=vmem, size = 0x2000, scoped, tag = 'input window, operand 1, single buffered']
    #allocation6 [shape = 's32[1]{0}', space=sflag, size = 0x4, scoped, tag = 'scoped memory for tpu_custom_call.1']
    #allocation7 [shape = 'u8[512]{0}', space=vmem, size = 0x400, scoped, tag = 'input window, operand 2, single buffered']
    #allocation8 [shape = 'u8[512]{0}', space=vmem, size = 0x400, scoped, tag = 'input window, operand 3, single buffered']
    #allocation9 [shape = 's32[1]{0}', space=sflag, size = 0x4, scoped, tag = 'scoped memory for tpu_custom_call.1']
    #allocation10 [shape = 'u8[65536]{0}', space=vmem, size = 0x10000, scoped, tag = 'input window, operand 9, single buffered']
    #allocation11 [shape = 'u8[65536]{0}', space=vmem, size = 0x10000, scoped, tag = 'input window, operand 11, single buffered']
    #allocation12 [shape = 's32[1]{0}', space=sflag, size = 0x4, scoped, tag = 'scoped memory for tpu_custom_call.1']
    #allocation13 [shape = 'u8[8192]{0}', space=vmem, size = 0x2000, scoped, tag = 'output window, operand 0, single buffered']
    %18 = vsyncpa [#allocation3], 0
    %19 = vsyncpa [#allocation6], 0
    %20 = vsyncpa [#allocation9], 0
    %21 = vsyncpa [#allocation12], 0
    %22 = vsyncpa [#allocation4], 0
    // Predicated region
    $region2: #{tpu_custom_call.1} parent=1 // pred_check
      _
    $region3: #{tpu_custom_call.1} parent=1 // pred_check_branch
      %24 = sbr.rel (0) target = $region5
    $region4: #{tpu_custom_call.1} parent=1 // pred_region
      %26 = vsyncadd [#allocation3], 0
      %s27 = sshll.u32 %s0, 4
      %s28 = int_to_ptr.hbm [resolvable:$true] %s27
      %s29 = sshll.u32 [#allocation2], 4
      %s30 = int_to_ptr.vmem [resolvable:$true] %s29
      %35 = dma.hbm_to_vmem [thread:$0]  %s28, 512, %s30, [#allocation3], 64, 64, 4
    $region5: #{tpu_custom_call.1} parent=1 // pred_fallthru
      _
    // Predicated region
    $region6: #{tpu_custom_call.1} parent=1 // pred_check
      _
    $region7: #{tpu_custom_call.1} parent=1 // pred_check_branch
      %37 = sbr.rel (0) target = $region9
    $region8: #{tpu_custom_call.1} parent=1 // pred_region
      %39 = vsyncadd [#allocation6], 0
      %s40 = sshll.u32 %s1, 4
      %s41 = int_to_ptr.hbm [resolvable:$true] %s40
      %s42 = sshll.u32 [#allocation5], 4
      %s43 = int_to_ptr.vmem [resolvable:$true] %s42
      %48 = dma.hbm_to_vmem [thread:$0]  %s41, 256, %s43, [#allocation6], 64, 64, 4
    $region9: #{tpu_custom_call.1} parent=1 // pred_fallthru
      _
    // Predicated region
    $region10: #{tpu_custom_call.1} parent=1 // pred_check
      _
    $region11: #{tpu_custom_call.1} parent=1 // pred_check_branch
      %50 = sbr.rel (0) target = $region13
    $region12: #{tpu_custom_call.1} parent=1 // pred_region
      %52 = vsyncadd [#allocation6], 0
      %s54 = sshll.u32 %s2, 4
      %s55 = int_to_ptr.hbm [resolvable:$true] %s54
      %s56 = sshll.u32 [#allocation7], 4
      %s57 = int_to_ptr.vmem [resolvable:$true] %s56
      %59 = dma.hbm_to_vmem [thread:$0]  %s55, 16, %s57, [#allocation6]
    $region13: #{tpu_custom_call.1} parent=1 // pred_fallthru
      _
    // Predicated region
    $region14: #{tpu_custom_call.1} parent=1 // pred_check
      _
    $region15: #{tpu_custom_call.1} parent=1 // pred_check_branch
      %61 = sbr.rel (0) target = $region17
    $region16: #{tpu_custom_call.1} parent=1 // pred_region
      %63 = vsyncadd [#allocation9], 0
      %s65 = sshll.u32 %s3, 4
      %s66 = int_to_ptr.hbm [resolvable:$true] %s65
      %s67 = sshll.u32 [#allocation8], 4
      %s68 = int_to_ptr.vmem [resolvable:$true] %s67
      %70 = dma.hbm_to_vmem [thread:$0]  %s66, 16, %s68, [#allocation9]
    $region17: #{tpu_custom_call.1} parent=1 // pred_fallthru
      _
    // Predicated region
    $region18: #{tpu_custom_call.1} parent=1 // pred_check
      _
    $region19: #{tpu_custom_call.1} parent=1 // pred_check_branch
      %72 = sbr.rel (0) target = $region21
    $region20: #{tpu_custom_call.1} parent=1 // pred_region
      _
    $region21: #{tpu_custom_call.1} parent=1 // pred_fallthru
      _
    // Predicated region
    $region22: #{tpu_custom_call.1} parent=1 // pred_check
      _
    $region23: #{tpu_custom_call.1} parent=1 // pred_check_branch
      %74 = sbr.rel (0) target = $region25
    $region24: #{tpu_custom_call.1} parent=1 // pred_region
      _
    $region25: #{tpu_custom_call.1} parent=1 // pred_fallthru
      _
    // Predicated region
    $region26: #{tpu_custom_call.1} parent=1 // pred_check
      _
    $region27: #{tpu_custom_call.1} parent=1 // pred_check_branch
      %76 = sbr.rel (0) target = $region29
    $region28: #{tpu_custom_call.1} parent=1 // pred_region
      _
    $region29: #{tpu_custom_call.1} parent=1 // pred_fallthru
      _
    // Predicated region
    $region30: #{tpu_custom_call.1} parent=1 // pred_check
      _
    $region31: #{tpu_custom_call.1} parent=1 // pred_check_branch
      %78 = sbr.rel (0) target = $region33
    $region32: #{tpu_custom_call.1} parent=1 // pred_region
      _
    $region33: #{tpu_custom_call.1} parent=1 // pred_fallthru
      _
    // Predicated region
    $region34: #{tpu_custom_call.1} parent=1 // pred_check
      _
    $region35: #{tpu_custom_call.1} parent=1 // pred_check_branch
      %80 = sbr.rel (0) target = $region37
    $region36: #{tpu_custom_call.1} parent=1 // pred_region
      _
    $region37: #{tpu_custom_call.1} parent=1 // pred_fallthru
      _
    // Predicated region
    $region38: #{tpu_custom_call.1} parent=1 // pred_check
      _
    $region39: #{tpu_custom_call.1} parent=1 // pred_check_branch
      %82 = sbr.rel (0) target = $region41
    $region40: #{tpu_custom_call.1} parent=1 // pred_region
      %84 = vsyncadd [#allocation9], 0
      %s85 = sshll.u32 %s9, 4
      %s86 = int_to_ptr.hbm [resolvable:$true] %s85
      %s87 = sshll.u32 [#allocation10], 4
      %s88 = int_to_ptr.vmem [resolvable:$true] %s87
      %93 = dma.hbm_to_vmem [thread:$0]  %s86, 2048, %s88, [#allocation9], 128, 128, 8
    $region41: #{tpu_custom_call.1} parent=1 // pred_fallthru
      _
    // Predicated region
    $region42: #{tpu_custom_call.1} parent=1 // pred_check
      _
    $region43: #{tpu_custom_call.1} parent=1 // pred_check_branch
      %95 = sbr.rel (0) target = $region45
    $region44: #{tpu_custom_call.1} parent=1 // pred_region
      _
    $region45: #{tpu_custom_call.1} parent=1 // pred_fallthru
      _
    // Predicated region
    $region46: #{tpu_custom_call.1} parent=1 // pred_check
      _
    $region47: #{tpu_custom_call.1} parent=1 // pred_check_branch
      %97 = sbr.rel (0) target = $region49
    $region48: #{tpu_custom_call.1} parent=1 // pred_region
      %99 = vsyncadd [#allocation12], 0
      %s100 = sshll.u32 %s11, 4
      %s101 = int_to_ptr.hbm [resolvable:$true] %s100
      %s102 = sshll.u32 [#allocation11], 4
      %s103 = int_to_ptr.vmem [resolvable:$true] %s102
      %108 = dma.hbm_to_vmem [thread:$0]  %s101, 2048, %s103, [#allocation12], 64, 64, 4
    $region49: #{tpu_custom_call.1} parent=1 // pred_fallthru
      _
    // Predicated region
    $region50: #{tpu_custom_call.1} parent=1 // pred_check
      _
    $region51: #{tpu_custom_call.1} parent=1 // pred_check_branch
      %110 = sbr.rel (0) target = $region53
    $region52: #{tpu_custom_call.1} parent=1 // pred_region
      _
    $region53: #{tpu_custom_call.1} parent=1 // pred_fallthru
      _
    // Predicated region
    $region54: #{tpu_custom_call.1} parent=1 // pred_check
      _
    $region55: #{tpu_custom_call.1} parent=1 // pred_check_branch
      %112 = sbr.rel (0) target = $region57
    $region56: #{tpu_custom_call.1} parent=1 // pred_region
      %114 = dma.done [#allocation3], 512
    $region57: #{tpu_custom_call.1} parent=1 // pred_fallthru
      _
    // Predicated region
    $region58: #{tpu_custom_call.1} parent=1 // pred_check
      _
    $region59: #{tpu_custom_call.1} parent=1 // pred_check_branch
      %116 = sbr.rel (0) target = $region61
    $region60: #{tpu_custom_call.1} parent=1 // pred_region
      %118 = dma.done [#allocation6], 256
    $region61: #{tpu_custom_call.1} parent=1 // pred_fallthru
      _
    // Predicated region
    $region62: #{tpu_custom_call.1} parent=1 // pred_check
      _
    $region63: #{tpu_custom_call.1} parent=1 // pred_check_branch
      %120 = sbr.rel (0) target = $region65
    $region64: #{tpu_custom_call.1} parent=1 // pred_region
      %122 = dma.done [#allocation6], 16
    $region65: #{tpu_custom_call.1} parent=1 // pred_fallthru
      _
    // Predicated region
    $region66: #{tpu_custom_call.1} parent=1 // pred_check
      _
    $region67: #{tpu_custom_call.1} parent=1 // pred_check_branch
      %124 = sbr.rel (0) target = $region69
    $region68: #{tpu_custom_call.1} parent=1 // pred_region
      %126 = dma.done [#allocation9], 16
    $region69: #{tpu_custom_call.1} parent=1 // pred_fallthru
      _
    // Predicated region
    $region70: #{tpu_custom_call.1} parent=1 // pred_check
      _
    $region71: #{tpu_custom_call.1} parent=1 // pred_check_branch
      %128 = sbr.rel (0) target = $region73
    $region72: #{tpu_custom_call.1} parent=1 // pred_region
      %130 = dma.done [#allocation9], 2048
    $region73: #{tpu_custom_call.1} parent=1 // pred_fallthru
      _
    // Predicated region
    $region74: #{tpu_custom_call.1} parent=1 // pred_check
      _
    $region75: #{tpu_custom_call.1} parent=1 // pred_check_branch
      %132 = sbr.rel (0) target = $region77
    $region76: #{tpu_custom_call.1} parent=1 // pred_region
      %134 = dma.done [#allocation12], 2048
    $region77: #{tpu_custom_call.1} parent=1 // pred_fallthru
      _
    %v136 = vld [vmem:[#allocation2] sm:$0xf]
    %v137 = vld [vmem:[#allocation2 + $0x4] sm:$0xf]
    %v138 = vld [vmem:[#allocation2 + $0x8] sm:$0xf]
    %v139 = vld [vmem:[#allocation2 + $0xc] sm:$0xf]
    %v140 = vld [vmem:[#allocation2 + $0x10] sm:$0xf]
    %v141 = vld [vmem:[#allocation2 + $0x14] sm:$0xf]
    %v142 = vld [vmem:[#allocation2 + $0x18] sm:$0xf]
    %v143 = vld [vmem:[#allocation2 + $0x1c] sm:$0xf]
    %v144 = vunpack.c.l.bf16 %v136
    %v145 = vunpack.c.l.bf16 %v137
    %v146 = vunpack.c.l.bf16 %v138
    %v147 = vunpack.c.l.bf16 %v139
    %v148 = vunpack.c.l.bf16 %v140
    %v149 = vunpack.c.l.bf16 %v141
    %v150 = vunpack.c.l.bf16 %v142
    %v151 = vunpack.c.l.bf16 %v143
    %v152 = vld [vmem:[#allocation5] sm:$0xf]
    %v153 = vld [vmem:[#allocation5 + $0x4] sm:$0xf]
    %v154 = vld [vmem:[#allocation5 + $0x8] sm:$0xf]
    %v155 = vld [vmem:[#allocation5 + $0xc] sm:$0xf]
    %v156 = vunpack.c.l.bf16 %v152
    %v157 = vunpack.c.l.bf16 %v153
    %v158 = vunpack.c.l.bf16 %v154
    %v159 = vunpack.c.l.bf16 %v155
    %v160 = vld [vmem:[#allocation7] sm:$0x1]
    %v161 = vld [vmem:[#allocation8] sm:$0x1]
    %162 = vadd.xlane.f32.xlu0 %v144
    %v163 = vpop.xlane.xlu0 %162
    %164 = vadd.xlane.f32.xlu0 %v145
    %v165 = vpop.xlane.xlu0 %164
    %166 = vadd.xlane.f32.xlu0 %v146
    %v167 = vpop.xlane.xlu0 %166
    %168 = vadd.xlane.f32.xlu0 %v147
    %v169 = vpop.xlane.xlu0 %168
    %170 = vadd.xlane.f32.xlu0 %v148
    %v171 = vpop.xlane.xlu0 %170
    %172 = vadd.xlane.f32.xlu0 %v149
    %v173 = vpop.xlane.xlu0 %172
    %174 = vadd.xlane.f32.xlu0 %v150
    %v175 = vpop.xlane.xlu0 %174
    %176 = vadd.xlane.f32.xlu0 %v151
    %v177 = vpop.xlane.xlu0 %176
    %v178 = vrcp.pop 128.0
    %v179 = vmul.f32 128.0, %v178
    %v180 = vsub.f32 1.0, %v179
    %v181 = vmul.f32 %v178, %v180
    %v182 = vadd.f32 %v178, %v181
    %vm183 = vweird.f32 %v178
    %v184 = vsel %vm183, %v178, %v182
    %v185 = vmul.f32 %v163, %v184
    %v186 = vmul.f32 %v165, %v184
    %v187 = vmul.f32 %v167, %v184
    %v188 = vmul.f32 %v169, %v184
    %v189 = vmul.f32 %v171, %v184
    %v190 = vmul.f32 %v173, %v184
    %v191 = vmul.f32 %v175, %v184
    %v192 = vmul.f32 %v177, %v184
    %v193 = vmul.f32 %v144, %v144
    %v194 = vmul.f32 %v145, %v145
    %v195 = vmul.f32 %v146, %v146
    %v196 = vmul.f32 %v147, %v147
    %v197 = vmul.f32 %v148, %v148
    %v198 = vmul.f32 %v149, %v149
    %v199 = vmul.f32 %v150, %v150
    %v200 = vmul.f32 %v151, %v151
    %201 = vadd.xlane.f32.xlu0 %v193
    %v202 = vpop.xlane.xlu0 %201
    %203 = vadd.xlane.f32.xlu0 %v194
    %v204 = vpop.xlane.xlu0 %203
    %205 = vadd.xlane.f32.xlu0 %v195
    %v206 = vpop.xlane.xlu0 %205
    %207 = vadd.xlane.f32.xlu0 %v196
    %v208 = vpop.xlane.xlu0 %207
    %209 = vadd.xlane.f32.xlu0 %v197
    %v210 = vpop.xlane.xlu0 %209
    %211 = vadd.xlane.f32.xlu0 %v198
    %v212 = vpop.xlane.xlu0 %211
    %213 = vadd.xlane.f32.xlu0 %v199
    %v214 = vpop.xlane.xlu0 %213
    %215 = vadd.xlane.f32.xlu0 %v200
    %v216 = vpop.xlane.xlu0 %215
    %v217 = vmul.f32 %v202, %v184
    %v218 = vmul.f32 %v204, %v184
    %v219 = vmul.f32 %v206, %v184
    %v220 = vmul.f32 %v208, %v184
    %v221 = vmul.f32 %v210, %v184
    %v222 = vmul.f32 %v212, %v184
    %v223 = vmul.f32 %v214, %v184
    %v224 = vmul.f32 %v216, %v184
    %v225 = vmul.f32 %v185, %v185
    %v226 = vmul.f32 %v186, %v186
    %v227 = vmul.f32 %v187, %v187
    %v228 = vmul.f32 %v188, %v188
    %v229 = vmul.f32 %v189, %v189
    %v230 = vmul.f32 %v190, %v190
    %v231 = vmul.f32 %v191, %v191
    %v232 = vmul.f32 %v192, %v192
    %v233 = vsub.f32 %v217, %v225
    %v234 = vsub.f32 %v218, %v226
    %v235 = vsub.f32 %v219, %v227
    %v236 = vsub.f32 %v220, %v228
    %v237 = vsub.f32 %v221, %v229
    %v238 = vsub.f32 %v222, %v230
    %v239 = vsub.f32 %v223, %v231
    %v240 = vsub.f32 %v224, %v232
    %v241 = vmax.f32 %v233, 0.0
    %v242 = vmax.f32 %v234, 0.0
    %v243 = vmax.f32 %v235, 0.0
    %v244 = vmax.f32 %v236, 0.0
    %v245 = vmax.f32 %v237, 0.0
    %v246 = vmax.f32 %v238, 0.0
    %v247 = vmax.f32 %v239, 0.0
    %v248 = vmax.f32 %v240, 0.0
    %v249 = vsub.f32 %v144, %v185
    %v250 = vsub.f32 %v145, %v186
    %v251 = vsub.f32 %v146, %v187
    %v252 = vsub.f32 %v147, %v188
    %v253 = vsub.f32 %v148, %v189
    %v254 = vsub.f32 %v149, %v190
    %v255 = vsub.f32 %v150, %v191
    %v256 = vsub.f32 %v151, %v192
    %v257 = vadd.f32 %v241, 1e-05
    %v258 = vadd.f32 %v242, 1e-05
    %v259 = vadd.f32 %v243, 1e-05
    %v260 = vadd.f32 %v244, 1e-05
    %v261 = vadd.f32 %v245, 1e-05
    %v262 = vadd.f32 %v246, 1e-05
    %v263 = vadd.f32 %v247, 1e-05
    %v264 = vadd.f32 %v248, 1e-05
    %v265 = vrsqrt.pop %v257
    %v266 = vmul.f32 %v265, %v257
    %v267 = vmul.f32 %v266, %v265
    %v268 = vmul.f32 0.5, %v267
    %v269 = vsub.f32 1.5, %v268
    %v270 = vmul.f32 %v265, %v269
    %vm271 = vweird.f32 %v257
    %vm272 = vweird.f32 %v265
    %vm273 = vmor %vm271, %vm272
    %v274 = vsel %vm273, %v265, %v270
    %v275 = vrsqrt.pop %v258
    %v276 = vmul.f32 %v275, %v258
    %v277 = vmul.f32 %v276, %v275
    %v278 = vmul.f32 0.5, %v277
    %v279 = vsub.f32 1.5, %v278
    %v280 = vmul.f32 %v275, %v279
    %vm281 = vweird.f32 %v258
    %vm282 = vweird.f32 %v275
    %vm283 = vmor %vm281, %vm282
    %v284 = vsel %vm283, %v275, %v280
    %v285 = vrsqrt.pop %v259
    %v286 = vmul.f32 %v285, %v259
    %v287 = vmul.f32 %v286, %v285
    %v288 = vmul.f32 0.5, %v287
    %v289 = vsub.f32 1.5, %v288
    %v290 = vmul.f32 %v285, %v289
    %vm291 = vweird.f32 %v259
    %vm292 = vweird.f32 %v285
    %vm293 = vmor %vm291, %vm292
    %v294 = vsel %vm293, %v285, %v290
    %v295 = vrsqrt.pop %v260
    %v296 = vmul.f32 %v295, %v260
    %v297 = vmul.f32 %v296, %v295
    %v298 = vmul.f32 0.5, %v297
    %v299 = vsub.f32 1.5, %v298
    %v300 = vmul.f32 %v295, %v299
    %vm301 = vweird.f32 %v260
    %vm302 = vweird.f32 %v295
    %vm303 = vmor %vm301, %vm302
    %v304 = vsel %vm303, %v295, %v300
    %v305 = vrsqrt.pop %v261
    %v306 = vmul.f32 %v305, %v261
    %v307 = vmul.f32 %v306, %v305
    %v308 = vmul.f32 0.5, %v307
    %v309 = vsub.f32 1.5, %v308
    %v310 = vmul.f32 %v305, %v309
    %vm311 = vweird.f32 %v261
    %vm312 = vweird.f32 %v305
    %vm313 = vmor %vm311, %vm312
    %v314 = vsel %vm313, %v305, %v310
    %v315 = vrsqrt.pop %v262
    %v316 = vmul.f32 %v315, %v262
    %v317 = vmul.f32 %v316, %v315
    %v318 = vmul.f32 0.5, %v317
    %v319 = vsub.f32 1.5, %v318
    %v320 = vmul.f32 %v315, %v319
    %vm321 = vweird.f32 %v262
    %vm322 = vweird.f32 %v315
    %vm323 = vmor %vm321, %vm322
    %v324 = vsel %vm323, %v315, %v320
    %v325 = vrsqrt.pop %v263
    %v326 = vmul.f32 %v325, %v263
    %v327 = vmul.f32 %v326, %v325
    %v328 = vmul.f32 0.5, %v327
    %v329 = vsub.f32 1.5, %v328
    %v330 = vmul.f32 %v325, %v329
    %vm331 = vweird.f32 %v263
    %vm332 = vweird.f32 %v325
    %vm333 = vmor %vm331, %vm332
    %v334 = vsel %vm333, %v325, %v330
    %v335 = vrsqrt.pop %v264
    %v336 = vmul.f32 %v335, %v264
    %v337 = vmul.f32 %v336, %v335
    %v338 = vmul.f32 0.5, %v337
    %v339 = vsub.f32 1.5, %v338
    %v340 = vmul.f32 %v335, %v339
    %vm341 = vweird.f32 %v264
    %vm342 = vweird.f32 %v335
    %vm343 = vmor %vm341, %vm342
    %v344 = vsel %vm343, %v335, %v340
    %v345 = vmul.f32 %v249, %v274
    %v346 = vmul.f32 %v250, %v284
    %v347 = vmul.f32 %v251, %v294
    %v348 = vmul.f32 %v252, %v304
    %v349 = vmul.f32 %v253, %v314
    %v350 = vmul.f32 %v254, %v324
    %v351 = vmul.f32 %v255, %v334
    %v352 = vmul.f32 %v256, %v344
    %v354 = vperm.slane %v160, 0
    %v356 = vmul.f32 %v345, %v354
    %v357 = vmul.f32 %v346, %v354
    %v358 = vmul.f32 %v347, %v354
    %v359 = vmul.f32 %v348, %v354
    %v360 = vmul.f32 %v349, %v354
    %v361 = vmul.f32 %v350, %v354
    %v362 = vmul.f32 %v351, %v354
    %v363 = vmul.f32 %v352, %v354
    %v365 = vperm.slane %v161, 0
    %v367 = vadd.f32 %v356, %v365
    %v368 = vadd.f32 %v357, %v365
    %v369 = vadd.f32 %v358, %v365
    %v370 = vadd.f32 %v359, %v365
    %v371 = vadd.f32 %v360, %v365
    %v372 = vadd.f32 %v361, %v365
    %v373 = vadd.f32 %v362, %v365
    %v374 = vadd.f32 %v363, %v365
    %375 = vadd.xlane.f32.xlu0 %v156
    %v376 = vpop.xlane.xlu0 %375
    %377 = vadd.xlane.f32.xlu0 %v157
    %v378 = vpop.xlane.xlu0 %377
    %379 = vadd.xlane.f32.xlu0 %v158
    %v380 = vpop.xlane.xlu0 %379
    %381 = vadd.xlane.f32.xlu0 %v159
    %v382 = vpop.xlane.xlu0 %381
    %v383 = vmul.f32 %v376, %v184
    %v384 = vmul.f32 %v378, %v184
    %v385 = vmul.f32 %v380, %v184
    %v386 = vmul.f32 %v382, %v184
    %v387 = vmul.f32 %v156, %v156
    %v388 = vmul.f32 %v157, %v157
    %v389 = vmul.f32 %v158, %v158
    %v390 = vmul.f32 %v159, %v159
    %391 = vadd.xlane.f32.xlu0 %v387
    %v392 = vpop.xlane.xlu0 %391
    %393 = vadd.xlane.f32.xlu0 %v388
    %v394 = vpop.xlane.xlu0 %393
    %395 = vadd.xlane.f32.xlu0 %v389
    %v396 = vpop.xlane.xlu0 %395
    %397 = vadd.xlane.f32.xlu0 %v390
    %v398 = vpop.xlane.xlu0 %397
    %v399 = vmul.f32 %v392, %v184
    %v400 = vmul.f32 %v394, %v184
    %v401 = vmul.f32 %v396, %v184
    %v402 = vmul.f32 %v398, %v184
    %v403 = vmul.f32 %v383, %v383
    %v404 = vmul.f32 %v384, %v384
    %v405 = vmul.f32 %v385, %v385
    %v406 = vmul.f32 %v386, %v386
    %v407 = vsub.f32 %v399, %v403
    %v408 = vsub.f32 %v400, %v404
    %v409 = vsub.f32 %v401, %v405
    %v410 = vsub.f32 %v402, %v406
    %v411 = vmax.f32 %v407, 0.0
    %v412 = vmax.f32 %v408, 0.0
    %v413 = vmax.f32 %v409, 0.0
    %v414 = vmax.f32 %v410, 0.0
    %v415 = vsub.f32 %v156, %v383
    %v416 = vsub.f32 %v157, %v384
    %v417 = vsub.f32 %v158, %v385
    %v418 = vsub.f32 %v159, %v386
    %v419 = vadd.f32 %v411, 1e-05
    %v420 = vadd.f32 %v412, 1e-05
    %v421 = vadd.f32 %v413, 1e-05
    %v422 = vadd.f32 %v414, 1e-05
    %v423 = vrsqrt.pop %v419
    %v424 = vmul.f32 %v423, %v419
    %v425 = vmul.f32 %v424, %v423
    %v426 = vmul.f32 0.5, %v425
    %v427 = vsub.f32 1.5, %v426
    %v428 = vmul.f32 %v423, %v427
    %vm429 = vweird.f32 %v419
    %vm430 = vweird.f32 %v423
    %vm431 = vmor %vm429, %vm430
    %v432 = vsel %vm431, %v423, %v428
    %v433 = vrsqrt.pop %v420
    %v434 = vmul.f32 %v433, %v420
    %v435 = vmul.f32 %v434, %v433
    %v436 = vmul.f32 0.5, %v435
    %v437 = vsub.f32 1.5, %v436
    %v438 = vmul.f32 %v433, %v437
    %vm439 = vweird.f32 %v420
    %vm440 = vweird.f32 %v433
    %vm441 = vmor %vm439, %vm440
    %v442 = vsel %vm441, %v433, %v438
    %v443 = vrsqrt.pop %v421
    %v444 = vmul.f32 %v443, %v421
    %v445 = vmul.f32 %v444, %v443
    %v446 = vmul.f32 0.5, %v445
    %v447 = vsub.f32 1.5, %v446
    %v448 = vmul.f32 %v443, %v447
    %vm449 = vweird.f32 %v421
    %vm450 = vweird.f32 %v443
    %vm451 = vmor %vm449, %vm450
    %v452 = vsel %vm451, %v443, %v448
    %v453 = vrsqrt.pop %v422
    %v454 = vmul.f32 %v453, %v422
    %v455 = vmul.f32 %v454, %v453
    %v456 = vmul.f32 0.5, %v455
    %v457 = vsub.f32 1.5, %v456
    %v458 = vmul.f32 %v453, %v457
    %vm459 = vweird.f32 %v422
    %vm460 = vweird.f32 %v453
    %vm461 = vmor %vm459, %vm460
    %v462 = vsel %vm461, %v453, %v458
    %v463 = vmul.f32 %v415, %v432
    %v464 = vmul.f32 %v416, %v442
    %v465 = vmul.f32 %v417, %v452
    %v466 = vmul.f32 %v418, %v462
    %v467 = vmul.f32 %v463, %v354
    %v468 = vmul.f32 %v464, %v354
    %v469 = vmul.f32 %v465, %v354
    %v470 = vmul.f32 %v466, %v354
    %v471 = vadd.f32 %v467, %v365
    %v472 = vadd.f32 %v468, %v365
    %v473 = vadd.f32 %v469, %v365
    %v474 = vadd.f32 %v470, %v365
    %v475 = vpack.c.bf16 %v367, %v367
    %v476 = vpack.c.bf16 %v368, %v368
    %v477 = vpack.c.bf16 %v369, %v369
    %v478 = vpack.c.bf16 %v370, %v370
    %v479 = vpack.c.bf16 %v371, %v371
    %v480 = vpack.c.bf16 %v372, %v372
    %v481 = vpack.c.bf16 %v373, %v373
    %v482 = vpack.c.bf16 %v374, %v374
    %v483 = vpack.c.bf16 %v471, %v471
    %v484 = vpack.c.bf16 %v472, %v472
    %v485 = vpack.c.bf16 %v473, %v473
    %v486 = vpack.c.bf16 %v474, %v474
    %v487 = vld [vmem:[%s4] sm:$0xf]
    %v488 = vld [vmem:[%s5] sm:$0xf]
    %vm489 = vcmask 64512
    %v491 = vsel %vm489, %v488, 0
    %vm493 = vcmask 1043456
    %v495 = vsel %vm493, %v483, 0
    %497 = vmatpush.bf16.msra.mxu0 0
    %498 = vmatpush.bf16.msra.mxu0 0
    %499 = vmatpush.bf16.msra.mxu0 0
    %500 = vmatpush.bf16.msra.mxu0 0
    %501 = vmatpush.bf16.msra.mxu0 0
    %502 = vmatpush.bf16.msra.mxu0 0
    %503 = vmatpush.bf16.msra.mxu0 0
    %504 = vmatpush.bf16.msra.mxu0 %v495
    %505 = vmatmul.bf16.gmra.mxu0 %v491
    %v506 = vpop.f32.mrf.mxu0
    %v507 = vadd.f32 0.0, %v506
    %v508 = vpop.f32.mrf.mxu0
    %509 = vdwg.mxu0
    %v511 = vsel %vm493, %v484, 0
    %513 = vmatpush.bf16.msra.mxu0 0
    %514 = vmatpush.bf16.msra.mxu0 0
    %515 = vmatpush.bf16.msra.mxu0 0
    %516 = vmatpush.bf16.msra.mxu0 0
    %517 = vmatpush.bf16.msra.mxu0 0
    %518 = vmatpush.bf16.msra.mxu0 0
    %519 = vmatpush.bf16.msra.mxu0 0
    %520 = vmatpush.bf16.msra.mxu0 %v511
    %521 = vmatmul.bf16.gmra.mxu0 %v491
    %v522 = vpop.f32.mrf.mxu0
    %v523 = vadd.f32 0.0, %v522
    %v524 = vpop.f32.mrf.mxu0
    %525 = vdwg.mxu0
    %v527 = vsel %vm493, %v485, 0
    %529 = vmatpush.bf16.msra.mxu0 0
    %530 = vmatpush.bf16.msra.mxu0 0
    %531 = vmatpush.bf16.msra.mxu0 0
    %532 = vmatpush.bf16.msra.mxu0 0
    %533 = vmatpush.bf16.msra.mxu0 0
    %534 = vmatpush.bf16.msra.mxu0 0
    %535 = vmatpush.bf16.msra.mxu0 0
    %536 = vmatpush.bf16.msra.mxu0 %v527
    %537 = vmatmul.bf16.gmra.mxu0 %v491
    %v538 = vpop.f32.mrf.mxu0
    %v539 = vadd.f32 0.0, %v538
    %v540 = vpop.f32.mrf.mxu0
    %541 = vdwg.mxu0
    %v543 = vsel %vm493, %v486, 0
    %545 = vmatpush.bf16.msra.mxu0 0
    %546 = vmatpush.bf16.msra.mxu0 0
    %547 = vmatpush.bf16.msra.mxu0 0
    %548 = vmatpush.bf16.msra.mxu0 0
    %549 = vmatpush.bf16.msra.mxu0 0
    %550 = vmatpush.bf16.msra.mxu0 0
    %551 = vmatpush.bf16.msra.mxu0 0
    %552 = vmatpush.bf16.msra.mxu0 %v543
    %553 = vmatmul.bf16.gmra.mxu0 %v491
    %v554 = vpop.f32.mrf.mxu0
    %v555 = vadd.f32 0.0, %v554
    %v556 = vpop.f32.mrf.mxu0
    %557 = vdwg.mxu0
    %v560 = vunpack.c.l.b16 %v475
    %v561 = vunpack.c.l.b16 %v476
    %v562 = vpack.c.b16 %v561, %v560
    %vm564 = vcmask 130048
    %v566 = vsel %vm564, %v487, 0
    %568 = vmatpush.bf16.msra.mxu0 0
    %569 = vmatpush.bf16.msra.mxu0 0
    %570 = vmatpush.bf16.msra.mxu0 0
    %571 = vmatpush.bf16.msra.mxu0 0
    %572 = vmatpush.bf16.msra.mxu0 0
    %573 = vmatpush.bf16.msra.mxu0 0
    %574 = vmatpush.bf16.msra.mxu0 0
    %575 = vmatpush.bf16.msra.mxu0 %v562
    %576 = vmatmul.bf16.gmra.mxu0 %v566
    %v577 = vpop.f32.mrf.mxu0
    %v578 = vadd.f32 %v507, %v577
    %v579 = vpop.f32.mrf.mxu0
    %580 = vdwg.mxu0
    %v583 = vunpack.c.l.b16 %v477
    %v584 = vunpack.c.l.b16 %v478
    %v585 = vpack.c.b16 %v584, %v583
    %587 = vmatpush.bf16.msra.mxu0 0
    %588 = vmatpush.bf16.msra.mxu0 0
    %589 = vmatpush.bf16.msra.mxu0 0
    %590 = vmatpush.bf16.msra.mxu0 0
    %591 = vmatpush.bf16.msra.mxu0 0
    %592 = vmatpush.bf16.msra.mxu0 0
    %593 = vmatpush.bf16.msra.mxu0 0
    %594 = vmatpush.bf16.msra.mxu0 %v585
    %595 = vmatmul.bf16.gmra.mxu0 %v566
    %v596 = vpop.f32.mrf.mxu0
    %v597 = vadd.f32 %v523, %v596
    %v598 = vpop.f32.mrf.mxu0
    %599 = vdwg.mxu0
    %v602 = vunpack.c.l.b16 %v479
    %v603 = vunpack.c.l.b16 %v480
    %v604 = vpack.c.b16 %v603, %v602
    %606 = vmatpush.bf16.msra.mxu0 0
    %607 = vmatpush.bf16.msra.mxu0 0
    %608 = vmatpush.bf16.msra.mxu0 0
    %609 = vmatpush.bf16.msra.mxu0 0
    %610 = vmatpush.bf16.msra.mxu0 0
    %611 = vmatpush.bf16.msra.mxu0 0
    %612 = vmatpush.bf16.msra.mxu0 0
    %613 = vmatpush.bf16.msra.mxu0 %v604
    %614 = vmatmul.bf16.gmra.mxu0 %v566
    %v615 = vpop.f32.mrf.mxu0
    %v616 = vadd.f32 %v539, %v615
    %v617 = vpop.f32.mrf.mxu0
    %618 = vdwg.mxu0
    %v621 = vunpack.c.l.b16 %v481
    %v622 = vunpack.c.l.b16 %v482
    %v623 = vpack.c.b16 %v622, %v621
    %625 = vmatpush.bf16.msra.mxu0 0
    %626 = vmatpush.bf16.msra.mxu0 0
    %627 = vmatpush.bf16.msra.mxu0 0
    %628 = vmatpush.bf16.msra.mxu0 0
    %629 = vmatpush.bf16.msra.mxu0 0
    %630 = vmatpush.bf16.msra.mxu0 0
    %631 = vmatpush.bf16.msra.mxu0 0
    %632 = vmatpush.bf16.msra.mxu0 %v623
    %633 = vmatmul.bf16.gmra.mxu0 %v566
    %v634 = vpop.f32.mrf.mxu0
    %v635 = vadd.f32 %v555, %v634
    %v636 = vpop.f32.mrf.mxu0
    %637 = vdwg.mxu0
    %v638 = vld [vmem:[%s6] sm:$0xff]
    %640 = vset.pattern.permute.xlu0 0
    %641 = vperm.xlu0 %640, %v638
    %v642 = vpop.permute.xlu0 %641
    %v644 = vadd.f32 %v578, %v642
    %v645 = vadd.f32 %v597, %v642
    %v646 = vadd.f32 %v616, %v642
    %v647 = vadd.f32 %v635, %v642
    %v648 = vmax.f32 %v644, 0.0
    %v649 = vmax.f32 %v645, 0.0
    %v650 = vmax.f32 %v646, 0.0
    %v651 = vmax.f32 %v647, 0.0
    %v652 = vadd.f32 %v648, %v156
    %v653 = vadd.f32 %v649, %v157
    %v654 = vadd.f32 %v650, %v158
    %v655 = vadd.f32 %v651, %v159
    %v656 = vld [vmem:[%s7] sm:$0x1]
    %v657 = vld [vmem:[%s8] sm:$0x1]
    %658 = vadd.xlane.f32.xlu0 %v652
    %v659 = vpop.xlane.xlu0 %658
    %660 = vadd.xlane.f32.xlu0 %v653
    %v661 = vpop.xlane.xlu0 %660
    %662 = vadd.xlane.f32.xlu0 %v654
    %v663 = vpop.xlane.xlu0 %662
    %664 = vadd.xlane.f32.xlu0 %v655
    %v665 = vpop.xlane.xlu0 %664
    %v666 = vmul.f32 %v659, %v184
    %v667 = vmul.f32 %v661, %v184
    %v668 = vmul.f32 %v663, %v184
    %v669 = vmul.f32 %v665, %v184
    %v670 = vmul.f32 %v652, %v652
    %v671 = vmul.f32 %v653, %v653
    %v672 = vmul.f32 %v654, %v654
    %v673 = vmul.f32 %v655, %v655
    %674 = vadd.xlane.f32.xlu0 %v670
    %v675 = vpop.xlane.xlu0 %674
    %676 = vadd.xlane.f32.xlu0 %v671
    %v677 = vpop.xlane.xlu0 %676
    %678 = vadd.xlane.f32.xlu0 %v672
    %v679 = vpop.xlane.xlu0 %678
    %680 = vadd.xlane.f32.xlu0 %v673
    %v681 = vpop.xlane.xlu0 %680
    %v682 = vmul.f32 %v675, %v184
    %v683 = vmul.f32 %v677, %v184
    %v684 = vmul.f32 %v679, %v184
    %v685 = vmul.f32 %v681, %v184
    %v686 = vmul.f32 %v666, %v666
    %v687 = vmul.f32 %v667, %v667
    %v688 = vmul.f32 %v668, %v668
    %v689 = vmul.f32 %v669, %v669
    %v690 = vsub.f32 %v682, %v686
    %v691 = vsub.f32 %v683, %v687
    %v692 = vsub.f32 %v684, %v688
    %v693 = vsub.f32 %v685, %v689
    %v694 = vmax.f32 %v690, 0.0
    %v695 = vmax.f32 %v691, 0.0
    %v696 = vmax.f32 %v692, 0.0
    %v697 = vmax.f32 %v693, 0.0
    %v698 = vsub.f32 %v652, %v666
    %v699 = vsub.f32 %v653, %v667
    %v700 = vsub.f32 %v654, %v668
    %v701 = vsub.f32 %v655, %v669
    %v702 = vadd.f32 %v694, 1e-05
    %v703 = vadd.f32 %v695, 1e-05
    %v704 = vadd.f32 %v696, 1e-05
    %v705 = vadd.f32 %v697, 1e-05
    %v706 = vrsqrt.pop %v702
    %v707 = vmul.f32 %v706, %v702
    %v708 = vmul.f32 %v707, %v706
    %v709 = vmul.f32 0.5, %v708
    %v710 = vsub.f32 1.5, %v709
    %v711 = vmul.f32 %v706, %v710
    %vm712 = vweird.f32 %v702
    %vm713 = vweird.f32 %v706
    %vm714 = vmor %vm712, %vm713
    %v715 = vsel %vm714, %v706, %v711
    %v716 = vrsqrt.pop %v703
    %v717 = vmul.f32 %v716, %v703
    %v718 = vmul.f32 %v717, %v716
    %v719 = vmul.f32 0.5, %v718
    %v720 = vsub.f32 1.5, %v719
    %v721 = vmul.f32 %v716, %v720
    %vm722 = vweird.f32 %v703
    %vm723 = vweird.f32 %v716
    %vm724 = vmor %vm722, %vm723
    %v725 = vsel %vm724, %v716, %v721
    %v726 = vrsqrt.pop %v704
    %v727 = vmul.f32 %v726, %v704
    %v728 = vmul.f32 %v727, %v726
    %v729 = vmul.f32 0.5, %v728
    %v730 = vsub.f32 1.5, %v729
    %v731 = vmul.f32 %v726, %v730
    %vm732 = vweird.f32 %v704
    %vm733 = vweird.f32 %v726
    %vm734 = vmor %vm732, %vm733
    %v735 = vsel %vm734, %v726, %v731
    %v736 = vrsqrt.pop %v705
    %v737 = vmul.f32 %v736, %v705
    %v738 = vmul.f32 %v737, %v736
    %v739 = vmul.f32 0.5, %v738
    %v740 = vsub.f32 1.5, %v739
    %v741 = vmul.f32 %v736, %v740
    %vm742 = vweird.f32 %v705
    %vm743 = vweird.f32 %v736
    %vm744 = vmor %vm742, %vm743
    %v745 = vsel %vm744, %v736, %v741
    %v746 = vmul.f32 %v698, %v715
    %v747 = vmul.f32 %v699, %v725
    %v748 = vmul.f32 %v700, %v735
    %v749 = vmul.f32 %v701, %v745
    %v751 = vperm.slane %v656, 0
    %v753 = vmul.f32 %v746, %v751
    %v754 = vmul.f32 %v747, %v751
    %v755 = vmul.f32 %v748, %v751
    %v756 = vmul.f32 %v749, %v751
    %v758 = vperm.slane %v657, 0
    %v760 = vadd.f32 %v753, %v758
    %v761 = vadd.f32 %v754, %v758
    %v762 = vadd.f32 %v755, %v758
    %v763 = vadd.f32 %v756, %v758
    %v764 = vpack.c.bf16 %v761, %v760
    %v765 = vpack.c.bf16 %v763, %v762
    %v766 = vld [vmem:[#allocation10] sm:$0xff]
    %v767 = vld [vmem:[#allocation10 + $0x8] sm:$0xff]
    %v768 = vld [vmem:[#allocation10 + $0x10] sm:$0xff]
    %v769 = vld [vmem:[#allocation10 + $0x18] sm:$0xff]
    %v770 = vld [vmem:[#allocation10 + $0x20] sm:$0xff]
    %v771 = vld [vmem:[#allocation10 + $0x28] sm:$0xff]
    %v772 = vld [vmem:[#allocation10 + $0x30] sm:$0xff]
    %v773 = vld [vmem:[#allocation10 + $0x38] sm:$0xff]
    %v774 = vld [vmem:[#allocation10 + $0x40] sm:$0xff]
    %v775 = vld [vmem:[#allocation10 + $0x48] sm:$0xff]
    %v776 = vld [vmem:[#allocation10 + $0x50] sm:$0xff]
    %v777 = vld [vmem:[#allocation10 + $0x58] sm:$0xff]
    %v778 = vld [vmem:[#allocation10 + $0x60] sm:$0xff]
    %v779 = vld [vmem:[#allocation10 + $0x68] sm:$0xff]
    %v780 = vld [vmem:[#allocation10 + $0x70] sm:$0xff]
    %v781 = vld [vmem:[#allocation10 + $0x78] sm:$0xff]
    %v782 = vld [vmem:[%s10] sm:$0x3]
    %v784 = vperm.slane %v782, 0
    %v785 = vperm.slane %v782, 1
    %v804 = vunpack.c.l.b16 %v766
    %v805 = vunpack.c.h.b16 %v766
    %v806 = vunpack.c.l.b16 %v767
    %v807 = vunpack.c.h.b16 %v767
    %v808 = vunpack.c.l.b16 %v768
    %v809 = vunpack.c.h.b16 %v768
    %v810 = vunpack.c.l.b16 %v769
    %v811 = vunpack.c.h.b16 %v769
    %v812 = vunpack.c.l.b16 %v770
    %v813 = vunpack.c.h.b16 %v770
    %v814 = vunpack.c.l.b16 %v771
    %v815 = vunpack.c.h.b16 %v771
    %v816 = vunpack.c.l.b16 %v772
    %v817 = vunpack.c.h.b16 %v772
    %v818 = vunpack.c.l.b16 %v773
    %v819 = vunpack.c.h.b16 %v773
    %v820 = vunpack.c.l.b16 %v774
    %v821 = vunpack.c.h.b16 %v774
    %v822 = vunpack.c.l.b16 %v775
    %v823 = vunpack.c.h.b16 %v775
    %v824 = vunpack.c.l.b16 %v776
    %v825 = vunpack.c.h.b16 %v776
    %v826 = vunpack.c.l.b16 %v777
    %v827 = vunpack.c.h.b16 %v777
    %v828 = vunpack.c.l.b16 %v778
    %v829 = vunpack.c.h.b16 %v778
    %v830 = vunpack.c.l.b16 %v779
    %v831 = vunpack.c.h.b16 %v779
    %v832 = vunpack.c.l.b16 %v780
    %v833 = vunpack.c.h.b16 %v780
    %v834 = vunpack.c.l.b16 %v781
    %v835 = vunpack.c.h.b16 %v781
    %v836 = vpack.c.b16 %v806, %v804
    %v837 = vpack.c.b16 %v807, %v805
    %v838 = vpack.c.b16 %v810, %v808
    %v839 = vpack.c.b16 %v811, %v809
    %v840 = vpack.c.b16 %v814, %v812
    %v841 = vpack.c.b16 %v815, %v813
    %v842 = vpack.c.b16 %v818, %v816
    %v843 = vpack.c.b16 %v819, %v817
    %v844 = vpack.c.b16 %v822, %v820
    %v845 = vpack.c.b16 %v823, %v821
    %v846 = vpack.c.b16 %v826, %v824
    %v847 = vpack.c.b16 %v827, %v825
    %v848 = vpack.c.b16 %v830, %v828
    %v849 = vpack.c.b16 %v831, %v829
    %v850 = vpack.c.b16 %v834, %v832
    %v851 = vpack.c.b16 %v835, %v833
    %868 = vmatpush.bf16.msra.mxu0 %v850
    %869 = vmatpush.bf16.msra.mxu0 %v848
    %870 = vmatpush.bf16.msra.mxu0 %v846
    %871 = vmatpush.bf16.msra.mxu0 %v844
    %872 = vmatpush.bf16.msra.mxu0 %v842
    %873 = vmatpush.bf16.msra.mxu0 %v840
    %874 = vmatpush.bf16.msra.mxu0 %v838
    %875 = vmatpush.bf16.msra.mxu0 %v836
    %876 = vmatmul.bf16.gmra.mxu0 %v764
    %v877 = vpop.f32.mrf.mxu0
    %v878 = vadd.f32 %v784, %v877
    %v879 = vpop.f32.mrf.mxu0
    %v880 = vadd.f32 %v784, %v879
    %881 = vmatmul.bf16.gmra.mxu0 %v765
    %v882 = vpop.f32.mrf.mxu0
    %v883 = vadd.f32 %v784, %v882
    %v884 = vpop.f32.mrf.mxu0
    %v885 = vadd.f32 %v784, %v884
    %886 = vdwg.mxu0
    %887 = vmatpush.bf16.msra.mxu0 %v851
    %888 = vmatpush.bf16.msra.mxu0 %v849
    %889 = vmatpush.bf16.msra.mxu0 %v847
    %890 = vmatpush.bf16.msra.mxu0 %v845
    %891 = vmatpush.bf16.msra.mxu0 %v843
    %892 = vmatpush.bf16.msra.mxu0 %v841
    %893 = vmatpush.bf16.msra.mxu0 %v839
    %894 = vmatpush.bf16.msra.mxu0 %v837
    %895 = vmatmul.bf16.gmra.mxu0 %v764
    %v896 = vpop.f32.mrf.mxu0
    %v897 = vadd.f32 %v785, %v896
    %v898 = vpop.f32.mrf.mxu0
    %v899 = vadd.f32 %v785, %v898
    %900 = vmatmul.bf16.gmra.mxu0 %v765
    %v901 = vpop.f32.mrf.mxu0
    %v902 = vadd.f32 %v785, %v901
    %v903 = vpop.f32.mrf.mxu0
    %v904 = vadd.f32 %v785, %v903
    %905 = vdwg.mxu0
    %v906 = vmax.f32 %v878, 0.0
    %v907 = vmax.f32 %v897, 0.0
    %v908 = vmax.f32 %v880, 0.0
    %v909 = vmax.f32 %v899, 0.0
    %v910 = vmax.f32 %v883, 0.0
    %v911 = vmax.f32 %v902, 0.0
    %v912 = vmax.f32 %v885, 0.0
    %v913 = vmax.f32 %v904, 0.0
    %v914 = vpack.c.bf16 %v908, %v906
    %v915 = vpack.c.bf16 %v909, %v907
    %v916 = vpack.c.bf16 %v912, %v910
    %v917 = vpack.c.bf16 %v913, %v911
    %v918 = vld [vmem:[#allocation11] sm:$0xf]
    %v919 = vld [vmem:[#allocation11 + $0x4] sm:$0xf]
    %v920 = vld [vmem:[#allocation11 + $0x8] sm:$0xf]
    %v921 = vld [vmem:[#allocation11 + $0xc] sm:$0xf]
    %v922 = vld [vmem:[#allocation11 + $0x10] sm:$0xf]
    %v923 = vld [vmem:[#allocation11 + $0x14] sm:$0xf]
    %v924 = vld [vmem:[#allocation11 + $0x18] sm:$0xf]
    %v925 = vld [vmem:[#allocation11 + $0x1c] sm:$0xf]
    %v926 = vld [vmem:[#allocation11 + $0x20] sm:$0xf]
    %v927 = vld [vmem:[#allocation11 + $0x24] sm:$0xf]
    %v928 = vld [vmem:[#allocation11 + $0x28] sm:$0xf]
    %v929 = vld [vmem:[#allocation11 + $0x2c] sm:$0xf]
    %v930 = vld [vmem:[#allocation11 + $0x30] sm:$0xf]
    %v931 = vld [vmem:[#allocation11 + $0x34] sm:$0xf]
    %v932 = vld [vmem:[#allocation11 + $0x38] sm:$0xf]
    %v933 = vld [vmem:[#allocation11 + $0x3c] sm:$0xf]
    %v934 = vld [vmem:[#allocation11 + $0x40] sm:$0xf]
    %v935 = vld [vmem:[#allocation11 + $0x44] sm:$0xf]
    %v936 = vld [vmem:[#allocation11 + $0x48] sm:$0xf]
    %v937 = vld [vmem:[#allocation11 + $0x4c] sm:$0xf]
    %v938 = vld [vmem:[#allocation11 + $0x50] sm:$0xf]
    %v939 = vld [vmem:[#allocation11 + $0x54] sm:$0xf]
    %v940 = vld [vmem:[#allocation11 + $0x58] sm:$0xf]
    %v941 = vld [vmem:[#allocation11 + $0x5c] sm:$0xf]
    %v942 = vld [vmem:[#allocation11 + $0x60] sm:$0xf]
    %v943 = vld [vmem:[#allocation11 + $0x64] sm:$0xf]
    %v944 = vld [vmem:[#allocation11 + $0x68] sm:$0xf]
    %v945 = vld [vmem:[#allocation11 + $0x6c] sm:$0xf]
    %v946 = vld [vmem:[#allocation11 + $0x70] sm:$0xf]
    %v947 = vld [vmem:[#allocation11 + $0x74] sm:$0xf]
    %v948 = vld [vmem:[#allocation11 + $0x78] sm:$0xf]
    %v949 = vld [vmem:[#allocation11 + $0x7c] sm:$0xf]
    %v950 = vld [vmem:[%s12] sm:$0x1]
    %v952 = vperm.slane %v950, 0
    %v986 = vunpack.c.l.b16 %v918
    %v987 = vunpack.c.l.b16 %v919
    %v988 = vunpack.c.l.b16 %v920
    %v989 = vunpack.c.l.b16 %v921
    %v990 = vunpack.c.l.b16 %v922
    %v991 = vunpack.c.l.b16 %v923
    %v992 = vunpack.c.l.b16 %v924
    %v993 = vunpack.c.l.b16 %v925
    %v994 = vunpack.c.l.b16 %v926
    %v995 = vunpack.c.l.b16 %v927
    %v996 = vunpack.c.l.b16 %v928
    %v997 = vunpack.c.l.b16 %v929
    %v998 = vunpack.c.l.b16 %v930
    %v999 = vunpack.c.l.b16 %v931
    %v1000 = vunpack.c.l.b16 %v932
    %v1001 = vunpack.c.l.b16 %v933
    %v1002 = vunpack.c.l.b16 %v934
    %v1003 = vunpack.c.l.b16 %v935
    %v1004 = vunpack.c.l.b16 %v936
    %v1005 = vunpack.c.l.b16 %v937
    %v1006 = vunpack.c.l.b16 %v938
    %v1007 = vunpack.c.l.b16 %v939
    %v1008 = vunpack.c.l.b16 %v940
    %v1009 = vunpack.c.l.b16 %v941
    %v1010 = vunpack.c.l.b16 %v942
    %v1011 = vunpack.c.l.b16 %v943
    %v1012 = vunpack.c.l.b16 %v944
    %v1013 = vunpack.c.l.b16 %v945
    %v1014 = vunpack.c.l.b16 %v946
    %v1015 = vunpack.c.l.b16 %v947
    %v1016 = vunpack.c.l.b16 %v948
    %v1017 = vunpack.c.l.b16 %v949
    %v1018 = vpack.c.b16 %v987, %v986
    %v1019 = vpack.c.b16 %v989, %v988
    %v1020 = vpack.c.b16 %v991, %v990
    %v1021 = vpack.c.b16 %v993, %v992
    %v1022 = vpack.c.b16 %v995, %v994
    %v1023 = vpack.c.b16 %v997, %v996
    %v1024 = vpack.c.b16 %v999, %v998
    %v1025 = vpack.c.b16 %v1001, %v1000
    %v1026 = vpack.c.b16 %v1003, %v1002
    %v1027 = vpack.c.b16 %v1005, %v1004
    %v1028 = vpack.c.b16 %v1007, %v1006
    %v1029 = vpack.c.b16 %v1009, %v1008
    %v1030 = vpack.c.b16 %v1011, %v1010
    %v1031 = vpack.c.b16 %v1013, %v1012
    %v1032 = vpack.c.b16 %v1015, %v1014
    %v1033 = vpack.c.b16 %v1017, %v1016
    %1050 = vmatpush.bf16.msra.mxu0 %v1025
    %1051 = vmatpush.bf16.msra.mxu0 %v1024
    %1052 = vmatpush.bf16.msra.mxu0 %v1023
    %1053 = vmatpush.bf16.msra.mxu0 %v1022
    %1054 = vmatpush.bf16.msra.mxu0 %v1021
    %1055 = vmatpush.bf16.msra.mxu0 %v1020
    %1056 = vmatpush.bf16.msra.mxu0 %v1019
    %1057 = vmatpush.bf16.msra.mxu0 %v1018
    %1058 = vmatmul.bf16.gmra.mxu0 %v914
    %v1059 = vpop.f32.mrf.mxu0
    %v1060 = vadd.f32 %v952, %v1059
    %v1061 = vpop.f32.mrf.mxu0
    %v1062 = vadd.f32 %v952, %v1061
    %1063 = vmatmul.bf16.gmra.mxu0 %v916
    %v1064 = vpop.f32.mrf.mxu0
    %v1065 = vadd.f32 %v952, %v1064
    %v1066 = vpop.f32.mrf.mxu0
    %v1067 = vadd.f32 %v952, %v1066
    %1068 = vdwg.mxu0
    %1069 = vmatpush.bf16.msra.mxu0 %v1033
    %1070 = vmatpush.bf16.msra.mxu0 %v1032
    %1071 = vmatpush.bf16.msra.mxu0 %v1031
    %1072 = vmatpush.bf16.msra.mxu0 %v1030
    %1073 = vmatpush.bf16.msra.mxu0 %v1029
    %1074 = vmatpush.bf16.msra.mxu0 %v1028
    %1075 = vmatpush.bf16.msra.mxu0 %v1027
    %1076 = vmatpush.bf16.msra.mxu0 %v1026
    %1077 = vmatmul.bf16.gmra.mxu0 %v915
    %v1078 = vpop.f32.mrf.mxu0
    %v1079 = vadd.f32 %v1060, %v1078
    %v1080 = vpop.f32.mrf.mxu0
    %v1081 = vadd.f32 %v1062, %v1080
    %1082 = vmatmul.bf16.gmra.mxu0 %v917
    %v1083 = vpop.f32.mrf.mxu0
    %v1084 = vadd.f32 %v1065, %v1083
    %v1085 = vpop.f32.mrf.mxu0
    %v1086 = vadd.f32 %v1067, %v1085
    %1087 = vdwg.mxu0
    %v1088 = vadd.f32 %v1079, %v652
    %v1089 = vadd.f32 %v1081, %v653
    %v1090 = vadd.f32 %v1084, %v654
    %v1091 = vadd.f32 %v1086, %v655
    %v1092 = vpack.c.bf16 %v1088, %v1088
    %v1093 = vpack.c.bf16 %v1089, %v1089
    %v1094 = vpack.c.bf16 %v1090, %v1090
    %v1095 = vpack.c.bf16 %v1091, %v1091
    %1096 = vst [vmem:[#allocation13] sm:$0xf] %v1092
    %1097 = vst [vmem:[#allocation13 + $0x4] sm:$0xf] %v1093
    %1098 = vst [vmem:[#allocation13 + $0x8] sm:$0xf] %v1094
    %1099 = vst [vmem:[#allocation13 + $0xc] sm:$0xf] %v1095
    // Predicated region
    $region78: #{tpu_custom_call.1} parent=1 // pred_check
      _
    $region79: #{tpu_custom_call.1} parent=1 // pred_check_branch
      %1101 = sbr.rel (0) target = $region81
    $region80: #{tpu_custom_call.1} parent=1 // pred_region
      %1103 = vsyncadd [#allocation4], 0
      %s1104 = sshll.u32 [#allocation13], 4
      %s1105 = int_to_ptr.vmem [resolvable:$true] %s1104
      %s1106 = sshll.u32 %s13, 4
      %s1107 = int_to_ptr.hbm [resolvable:$true] %s1106
      %1112 = dma.vmem_to_hbm [thread:$0]  %s1105, 256, %s1107, [#allocation4], 64, 64, 4
    $region81: #{tpu_custom_call.1} parent=1 // pred_fallthru
      _
    // Predicated region
    $region82: #{tpu_custom_call.1} parent=1 // pred_check
      _
    $region83: #{tpu_custom_call.1} parent=1 // pred_check_branch
      %1114 = sbr.rel (0) target = $region85
    $region84: #{tpu_custom_call.1} parent=1 // pred_region
      %1116 = dma.done [#allocation4], 256
    $region85: #{tpu_custom_call.1} parent=1 // pred_fallthru
      _
    %1117 = vsyncpa [#allocation3], 1
    %1118 = vsyncpa [#allocation6], 1
    %1119 = vsyncpa [#allocation9], 1
    %1120 = vsyncpa [#allocation12], 1
    %1121 = vsyncpa [#allocation4], 1

// kernel: tpu_custom_call.1
$region0: #{tpu_custom_call.1}
  #allocation0 [shape = 'u32[]', space=smem, size = 0x4, offset = 0x4, fixed_abs, tag = 'smem constant byte address 0x4 - core index']
  #allocation1 [shape = 'u32[72,128]{1,0:T(1,128)}', space=vmem, size = 0x9000, scoped, tag = 'internal scratch']
  %s0 = inlined_call_operand.hbm [shape: bf16[64,128], index: 0, kind: input, shape index: {}]
  %s1 = inlined_call_operand.hbm [shape: bf16[32,128], index: 1, kind: input, shape index: {}]
  %s2 = inlined_call_operand.hbm [shape: f32[1,128], index: 2, kind: input, shape index: {}]
  %s3 = inlined_call_operand.hbm [shape: f32[1,128], index: 3, kind: input, shape index: {}]
  %s4 = inlined_call_operand.vmem [shape: bf16[8,16], index: 4, kind: input, shape index: {}]
  %s5 = inlined_call_operand.vmem [shape: bf16[8,8], index: 5, kind: input, shape index: {}]
  %s6 = inlined_call_operand.vmem [shape: f32[8,1], index: 6, kind: input, shape index: {}]
  %s7 = inlined_call_operand.vmem [shape: f32[1,128], index: 7, kind: input, shape index: {}]
  %s8 = inlined_call_operand.vmem [shape: f32[1,128], index: 8, kind: input, shape index: {}]
  %s9 = inlined_call_operand.hbm [shape: bf16[128,256], index: 9, kind: input, shape index: {}]
  %s10 = inlined_call_operand.vmem [shape: f32[1,256], index: 10, kind: input, shape index: {}]
  %s11 = inlined_call_operand.hbm [shape: bf16[256,128], index: 11, kind: input, shape index: {}]
  %s12 = inlined_call_operand.vmem [shape: f32[1,128], index: 12, kind: input, shape index: {}]
  %s13 = inlined_call_operand.hbm [shape: bf16[32,128], index: 13, kind: output, shape index: {}]
  %s14 = sld [smem:[#allocation0]]
  $region86: #{tpu_custom_call.1} parent=0
    _
  %s16 = ssub.s32 1, %s14
  %s17 = scalar_select 0, %s16, %s14
  $region1: #{tpu_custom_call.1} parent=0
    #allocation2 [shape = 'u8[16384]{0}', space=vmem, size = 0x4000, scoped, tag = 'input window, operand 0, single buffered']
    #allocation3 [shape = 's32[1]{0}', space=sflag, size = 0x4, scoped, tag = 'scoped memory for tpu_custom_call.1']
    #allocation4 [shape = 's32[1]{0}', space=sflag, size = 0x4, scoped, tag = 'scoped memory for tpu_custom_call.1']
    #allocation5 [shape = 'u8[8192]{0}', space=vmem, size = 0x2000, scoped, tag = 'input window, operand 1, single buffered']
    #allocation6 [shape = 's32[1]{0}', space=sflag, size = 0x4, scoped, tag = 'scoped memory for tpu_custom_call.1']
    #allocation7 [shape = 'u8[512]{0}', space=vmem, size = 0x400, scoped, tag = 'input window, operand 2, single buffered']
    #allocation8 [shape = 'u8[512]{0}', space=vmem, size = 0x400, scoped, tag = 'input window, operand 3, single buffered']
    #allocation9 [shape = 's32[1]{0}', space=sflag, size = 0x4, scoped, tag = 'scoped memory for tpu_custom_call.1']
    #allocation10 [shape = 'u8[65536]{0}', space=vmem, size = 0x10000, scoped, tag = 'input window, operand 9, single buffered']
    #allocation11 [shape = 'u8[65536]{0}', space=vmem, size = 0x10000, scoped, tag = 'input window, operand 11, single buffered']
    #allocation12 [shape = 's32[1]{0}', space=sflag, size = 0x4, scoped, tag = 'scoped memory for tpu_custom_call.1']
    #allocation13 [shape = 'u8[8192]{0}', space=vmem, size = 0x2000, scoped, tag = 'output window, operand 0, single buffered']
    %18 = vsyncpa [#allocation3], 0
    %19 = vsyncpa [#allocation6], 0
    %20 = vsyncpa [#allocation9], 0
    %21 = vsyncpa [#allocation12], 0
    %22 = vsyncpa [#allocation4], 0
    // Predicated region
    $region2: #{tpu_custom_call.1} parent=1 // pred_check
      _
    $region3: #{tpu_custom_call.1} parent=1 // pred_check_branch
      %24 = sbr.rel (0) target = $region5
    $region4: #{tpu_custom_call.1} parent=1 // pred_region
      %26 = vsyncadd [#allocation3], 0
      %s27 = sshll.u32 %s0, 4
      %s28 = int_to_ptr.hbm [resolvable:$true] %s27
      %s29 = sshll.u32 [#allocation2], 4
      %s30 = int_to_ptr.vmem [resolvable:$true] %s29
      %35 = dma.hbm_to_vmem [thread:$0]  %s28, 512, %s30, [#allocation3], 64, 64, 4
    $region5: #{tpu_custom_call.1} parent=1 // pred_fallthru
      _
    // Predicated region
    $region6: #{tpu_custom_call.1} parent=1 // pred_check
      _
    $region7: #{tpu_custom_call.1} parent=1 // pred_check_branch
      %37 = sbr.rel (0) target = $region9
    $region8: #{tpu_custom_call.1} parent=1 // pred_region
      %39 = vsyncadd [#allocation6], 0
      %s40 = sshll.u32 %s1, 4
      %s41 = int_to_ptr.hbm [resolvable:$true] %s40
      %s42 = sshll.u32 [#allocation5], 4
      %s43 = int_to_ptr.vmem [resolvable:$true] %s42
      %48 = dma.hbm_to_vmem [thread:$0]  %s41, 256, %s43, [#allocation6], 64, 64, 4
    $region9: #{tpu_custom_call.1} parent=1 // pred_fallthru
      _
    // Predicated region
    $region10: #{tpu_custom_call.1} parent=1 // pred_check
      _
    $region11: #{tpu_custom_call.1} parent=1 // pred_check_branch
      %50 = sbr.rel (0) target = $region13
    $region12: #{tpu_custom_call.1} parent=1 // pred_region
      %52 = vsyncadd [#allocation6], 0
      %s54 = sshll.u32 %s2, 4
      %s55 = int_to_ptr.hbm [resolvable:$true] %s54
      %s56 = sshll.u32 [#allocation7], 4
      %s57 = int_to_ptr.vmem [resolvable:$true] %s56
      %59 = dma.hbm_to_vmem [thread:$0]  %s55, 16, %s57, [#allocation6]
    $region13: #{tpu_custom_call.1} parent=1 // pred_fallthru
      _
    // Predicated region
    $region14: #{tpu_custom_call.1} parent=1 // pred_check
      _
    $region15: #{tpu_custom_call.1} parent=1 // pred_check_branch
      %61 = sbr.rel (0) target = $region17
    $region16: #{tpu_custom_call.1} parent=1 // pred_region
      %63 = vsyncadd [#allocation9], 0
      %s65 = sshll.u32 %s3, 4
      %s66 = int_to_ptr.hbm [resolvable:$true] %s65
      %s67 = sshll.u32 [#allocation8], 4
      %s68 = int_to_ptr.vmem [resolvable:$true] %s67
      %70 = dma.hbm_to_vmem [thread:$0]  %s66, 16, %s68, [#allocation9]
    $region17: #{tpu_custom_call.1} parent=1 // pred_fallthru
      _
    // Predicated region
    $region18: #{tpu_custom_call.1} parent=1 // pred_check
      _
    $region19: #{tpu_custom_call.1} parent=1 // pred_check_branch
      %72 = sbr.rel (0) target = $region21
    $region20: #{tpu_custom_call.1} parent=1 // pred_region
      _
    $region21: #{tpu_custom_call.1} parent=1 // pred_fallthru
      _
    // Predicated region
    $region22: #{tpu_custom_call.1} parent=1 // pred_check
      _
    $region23: #{tpu_custom_call.1} parent=1 // pred_check_branch
      %74 = sbr.rel (0) target = $region25
    $region24: #{tpu_custom_call.1} parent=1 // pred_region
      _
    $region25: #{tpu_custom_call.1} parent=1 // pred_fallthru
      _
    // Predicated region
    $region26: #{tpu_custom_call.1} parent=1 // pred_check
      _
    $region27: #{tpu_custom_call.1} parent=1 // pred_check_branch
      %76 = sbr.rel (0) target = $region29
    $region28: #{tpu_custom_call.1} parent=1 // pred_region
      _
    $region29: #{tpu_custom_call.1} parent=1 // pred_fallthru
      _
    // Predicated region
    $region30: #{tpu_custom_call.1} parent=1 // pred_check
      _
    $region31: #{tpu_custom_call.1} parent=1 // pred_check_branch
      %78 = sbr.rel (0) target = $region33
    $region32: #{tpu_custom_call.1} parent=1 // pred_region
      _
    $region33: #{tpu_custom_call.1} parent=1 // pred_fallthru
      _
    // Predicated region
    $region34: #{tpu_custom_call.1} parent=1 // pred_check
      _
    $region35: #{tpu_custom_call.1} parent=1 // pred_check_branch
      %80 = sbr.rel (0) target = $region37
    $region36: #{tpu_custom_call.1} parent=1 // pred_region
      _
    $region37: #{tpu_custom_call.1} parent=1 // pred_fallthru
      _
    // Predicated region
    $region38: #{tpu_custom_call.1} parent=1 // pred_check
      _
    $region39: #{tpu_custom_call.1} parent=1 // pred_check_branch
      %82 = sbr.rel (0) target = $region41
    $region40: #{tpu_custom_call.1} parent=1 // pred_region
      %84 = vsyncadd [#allocation9], 0
      %s85 = sshll.u32 %s9, 4
      %s86 = int_to_ptr.hbm [resolvable:$true] %s85
      %s87 = sshll.u32 [#allocation10], 4
      %s88 = int_to_ptr.vmem [resolvable:$true] %s87
      %93 = dma.hbm_to_vmem [thread:$0]  %s86, 2048, %s88, [#allocation9], 128, 128, 8
    $region41: #{tpu_custom_call.1} parent=1 // pred_fallthru
      _
    // Predicated region
    $region42: #{tpu_custom_call.1} parent=1 // pred_check
      _
    $region43: #{tpu_custom_call.1} parent=1 // pred_check_branch
      %95 = sbr.rel (0) target = $region45
    $region44: #{tpu_custom_call.1} parent=1 // pred_region
      _
    $region45: #{tpu_custom_call.1} parent=1 // pred_fallthru
      _
    // Predicated region
    $region46: #{tpu_custom_call.1} parent=1 // pred_check
      _
    $region47: #{tpu_custom_call.1} parent=1 // pred_check_branch
      %97 = sbr.rel (0) target = $region49
    $region48: #{tpu_custom_call.1} parent=1 // pred_region
      %99 = vsyncadd [#allocation12], 0
      %s100 = sshll.u32 %s11, 4
      %s101 = int_to_ptr.hbm [resolvable:$true] %s100
      %s102 = sshll.u32 [#allocation11], 4
      %s103 = int_to_ptr.vmem [resolvable:$true] %s102
      %108 = dma.hbm_to_vmem [thread:$0]  %s101, 2048, %s103, [#allocation12], 64, 64, 4
    $region49: #{tpu_custom_call.1} parent=1 // pred_fallthru
      _
    // Predicated region
    $region50: #{tpu_custom_call.1} parent=1 // pred_check
      _
    $region51: #{tpu_custom_call.1} parent=1 // pred_check_branch
      %110 = sbr.rel (0) target = $region53
    $region52: #{tpu_custom_call.1} parent=1 // pred_region
      _
    $region53: #{tpu_custom_call.1} parent=1 // pred_fallthru
      _
    // Predicated region
    $region54: #{tpu_custom_call.1} parent=1 // pred_check
      _
    $region55: #{tpu_custom_call.1} parent=1 // pred_check_branch
      %112 = sbr.rel (0) target = $region57
    $region56: #{tpu_custom_call.1} parent=1 // pred_region
      %114 = dma.done [#allocation3], 512
    $region57: #{tpu_custom_call.1} parent=1 // pred_fallthru
      _
    // Predicated region
    $region58: #{tpu_custom_call.1} parent=1 // pred_check
      _
    $region59: #{tpu_custom_call.1} parent=1 // pred_check_branch
      %116 = sbr.rel (0) target = $region61
    $region60: #{tpu_custom_call.1} parent=1 // pred_region
      %118 = dma.done [#allocation6], 256
    $region61: #{tpu_custom_call.1} parent=1 // pred_fallthru
      _
    // Predicated region
    $region62: #{tpu_custom_call.1} parent=1 // pred_check
      _
    $region63: #{tpu_custom_call.1} parent=1 // pred_check_branch
      %120 = sbr.rel (0) target = $region65
    $region64: #{tpu_custom_call.1} parent=1 // pred_region
      %122 = dma.done [#allocation6], 16
    $region65: #{tpu_custom_call.1} parent=1 // pred_fallthru
      _
    // Predicated region
    $region66: #{tpu_custom_call.1} parent=1 // pred_check
      _
    $region67: #{tpu_custom_call.1} parent=1 // pred_check_branch
      %124 = sbr.rel (0) target = $region69
    $region68: #{tpu_custom_call.1} parent=1 // pred_region
      %126 = dma.done [#allocation9], 16
    $region69: #{tpu_custom_call.1} parent=1 // pred_fallthru
      _
    // Predicated region
    $region70: #{tpu_custom_call.1} parent=1 // pred_check
      _
    $region71: #{tpu_custom_call.1} parent=1 // pred_check_branch
      %128 = sbr.rel (0) target = $region73
    $region72: #{tpu_custom_call.1} parent=1 // pred_region
      %130 = dma.done [#allocation9], 2048
    $region73: #{tpu_custom_call.1} parent=1 // pred_fallthru
      _
    // Predicated region
    $region74: #{tpu_custom_call.1} parent=1 // pred_check
      _
    $region75: #{tpu_custom_call.1} parent=1 // pred_check_branch
      %132 = sbr.rel (0) target = $region77
    $region76: #{tpu_custom_call.1} parent=1 // pred_region
      %134 = dma.done [#allocation12], 2048
    $region77: #{tpu_custom_call.1} parent=1 // pred_fallthru
      _
    %v136 = vld [vmem:[#allocation2] sm:$0xf]
    %v137 = vld [vmem:[#allocation2 + $0x4] sm:$0xf]
    %v138 = vld [vmem:[#allocation2 + $0x8] sm:$0xf]
    %v139 = vld [vmem:[#allocation2 + $0xc] sm:$0xf]
    %v140 = vld [vmem:[#allocation2 + $0x10] sm:$0xf]
    %v141 = vld [vmem:[#allocation2 + $0x14] sm:$0xf]
    %v142 = vld [vmem:[#allocation2 + $0x18] sm:$0xf]
    %v143 = vld [vmem:[#allocation2 + $0x1c] sm:$0xf]
    %v144 = vunpack.c.l.bf16 %v136
    %v145 = vunpack.c.l.bf16 %v137
    %v146 = vunpack.c.l.bf16 %v138
    %v147 = vunpack.c.l.bf16 %v139
    %v148 = vunpack.c.l.bf16 %v140
    %v149 = vunpack.c.l.bf16 %v141
    %v150 = vunpack.c.l.bf16 %v142
    %v151 = vunpack.c.l.bf16 %v143
    %v152 = vld [vmem:[#allocation5] sm:$0xf]
    %v153 = vld [vmem:[#allocation5 + $0x4] sm:$0xf]
    %v154 = vld [vmem:[#allocation5 + $0x8] sm:$0xf]
    %v155 = vld [vmem:[#allocation5 + $0xc] sm:$0xf]
    %v156 = vunpack.c.l.bf16 %v152
    %v157 = vunpack.c.l.bf16 %v153
    %v158 = vunpack.c.l.bf16 %v154
    %v159 = vunpack.c.l.bf16 %v155
    %v160 = vld [vmem:[#allocation7] sm:$0x1]
    %v161 = vld [vmem:[#allocation8] sm:$0x1]
    %162 = vadd.xlane.f32.xlu0 %v144
    %v163 = vpop.xlane.xlu0 %162
    %164 = vadd.xlane.f32.xlu0 %v145
    %v165 = vpop.xlane.xlu0 %164
    %166 = vadd.xlane.f32.xlu0 %v146
    %v167 = vpop.xlane.xlu0 %166
    %168 = vadd.xlane.f32.xlu0 %v147
    %v169 = vpop.xlane.xlu0 %168
    %170 = vadd.xlane.f32.xlu0 %v148
    %v171 = vpop.xlane.xlu0 %170
    %172 = vadd.xlane.f32.xlu0 %v149
    %v173 = vpop.xlane.xlu0 %172
    %174 = vadd.xlane.f32.xlu0 %v150
    %v175 = vpop.xlane.xlu0 %174
    %176 = vadd.xlane.f32.xlu0 %v151
    %v177 = vpop.xlane.xlu0 %176
    %v178 = vrcp.pop 128.0
    %v179 = vmul.f32 128.0, %v178
    %v180 = vsub.f32 1.0, %v179
    %v181 = vmul.f32 %v178, %v180
    %v182 = vadd.f32 %v178, %v181
    %vm183 = vweird.f32 %v178
    %v184 = vsel %vm183, %v178, %v182
    %v185 = vmul.f32 %v163, %v184
    %v186 = vmul.f32 %v165, %v184
    %v187 = vmul.f32 %v167, %v184
    %v188 = vmul.f32 %v169, %v184
    %v189 = vmul.f32 %v171, %v184
    %v190 = vmul.f32 %v173, %v184
    %v191 = vmul.f32 %v175, %v184
    %v192 = vmul.f32 %v177, %v184
    %v193 = vmul.f32 %v144, %v144
    %v194 = vmul.f32 %v145, %v145
    %v195 = vmul.f32 %v146, %v146
    %v196 = vmul.f32 %v147, %v147
    %v197 = vmul.f32 %v148, %v148
    %v198 = vmul.f32 %v149, %v149
    %v199 = vmul.f32 %v150, %v150
    %v200 = vmul.f32 %v151, %v151
    %201 = vadd.xlane.f32.xlu0 %v193
    %v202 = vpop.xlane.xlu0 %201
    %203 = vadd.xlane.f32.xlu0 %v194
    %v204 = vpop.xlane.xlu0 %203
    %205 = vadd.xlane.f32.xlu0 %v195
    %v206 = vpop.xlane.xlu0 %205
    %207 = vadd.xlane.f32.xlu0 %v196
    %v208 = vpop.xlane.xlu0 %207
    %209 = vadd.xlane.f32.xlu0 %v197
    %v210 = vpop.xlane.xlu0 %209
    %211 = vadd.xlane.f32.xlu0 %v198
    %v212 = vpop.xlane.xlu0 %211
    %213 = vadd.xlane.f32.xlu0 %v199
    %v214 = vpop.xlane.xlu0 %213
    %215 = vadd.xlane.f32.xlu0 %v200
    %v216 = vpop.xlane.xlu0 %215
    %v217 = vmul.f32 %v202, %v184
    %v218 = vmul.f32 %v204, %v184
    %v219 = vmul.f32 %v206, %v184
    %v220 = vmul.f32 %v208, %v184
    %v221 = vmul.f32 %v210, %v184
    %v222 = vmul.f32 %v212, %v184
    %v223 = vmul.f32 %v214, %v184
    %v224 = vmul.f32 %v216, %v184
    %v225 = vmul.f32 %v185, %v185
    %v226 = vmul.f32 %v186, %v186
    %v227 = vmul.f32 %v187, %v187
    %v228 = vmul.f32 %v188, %v188
    %v229 = vmul.f32 %v189, %v189
    %v230 = vmul.f32 %v190, %v190
    %v231 = vmul.f32 %v191, %v191
    %v232 = vmul.f32 %v192, %v192
    %v233 = vsub.f32 %v217, %v225
    %v234 = vsub.f32 %v218, %v226
    %v235 = vsub.f32 %v219, %v227
    %v236 = vsub.f32 %v220, %v228
    %v237 = vsub.f32 %v221, %v229
    %v238 = vsub.f32 %v222, %v230
    %v239 = vsub.f32 %v223, %v231
    %v240 = vsub.f32 %v224, %v232
    %v241 = vmax.f32 %v233, 0.0
    %v242 = vmax.f32 %v234, 0.0
    %v243 = vmax.f32 %v235, 0.0
    %v244 = vmax.f32 %v236, 0.0
    %v245 = vmax.f32 %v237, 0.0
    %v246 = vmax.f32 %v238, 0.0
    %v247 = vmax.f32 %v239, 0.0
    %v248 = vmax.f32 %v240, 0.0
    %v249 = vsub.f32 %v144, %v185
    %v250 = vsub.f32 %v145, %v186
    %v251 = vsub.f32 %v146, %v187
    %v252 = vsub.f32 %v147, %v188
    %v253 = vsub.f32 %v148, %v189
    %v254 = vsub.f32 %v149, %v190
    %v255 = vsub.f32 %v150, %v191
    %v256 = vsub.f32 %v151, %v192
    %v257 = vadd.f32 %v241, 1e-05
    %v258 = vadd.f32 %v242, 1e-05
    %v259 = vadd.f32 %v243, 1e-05
    %v260 = vadd.f32 %v244, 1e-05
    %v261 = vadd.f32 %v245, 1e-05
    %v262 = vadd.f32 %v246, 1e-05
    %v263 = vadd.f32 %v247, 1e-05
    %v264 = vadd.f32 %v248, 1e-05
    %v265 = vrsqrt.pop %v257
    %v266 = vmul.f32 %v265, %v257
    %v267 = vmul.f32 %v266, %v265
    %v268 = vmul.f32 0.5, %v267
    %v269 = vsub.f32 1.5, %v268
    %v270 = vmul.f32 %v265, %v269
    %vm271 = vweird.f32 %v257
    %vm272 = vweird.f32 %v265
    %vm273 = vmor %vm271, %vm272
    %v274 = vsel %vm273, %v265, %v270
    %v275 = vrsqrt.pop %v258
    %v276 = vmul.f32 %v275, %v258
    %v277 = vmul.f32 %v276, %v275
    %v278 = vmul.f32 0.5, %v277
    %v279 = vsub.f32 1.5, %v278
    %v280 = vmul.f32 %v275, %v279
    %vm281 = vweird.f32 %v258
    %vm282 = vweird.f32 %v275
    %vm283 = vmor %vm281, %vm282
    %v284 = vsel %vm283, %v275, %v280
    %v285 = vrsqrt.pop %v259
    %v286 = vmul.f32 %v285, %v259
    %v287 = vmul.f32 %v286, %v285
    %v288 = vmul.f32 0.5, %v287
    %v289 = vsub.f32 1.5, %v288
    %v290 = vmul.f32 %v285, %v289
    %vm291 = vweird.f32 %v259
    %vm292 = vweird.f32 %v285
    %vm293 = vmor %vm291, %vm292
    %v294 = vsel %vm293, %v285, %v290
    %v295 = vrsqrt.pop %v260
    %v296 = vmul.f32 %v295, %v260
    %v297 = vmul.f32 %v296, %v295
    %v298 = vmul.f32 0.5, %v297
    %v299 = vsub.f32 1.5, %v298
    %v300 = vmul.f32 %v295, %v299
    %vm301 = vweird.f32 %v260
    %vm302 = vweird.f32 %v295
    %vm303 = vmor %vm301, %vm302
    %v304 = vsel %vm303, %v295, %v300
    %v305 = vrsqrt.pop %v261
    %v306 = vmul.f32 %v305, %v261
    %v307 = vmul.f32 %v306, %v305
    %v308 = vmul.f32 0.5, %v307
    %v309 = vsub.f32 1.5, %v308
    %v310 = vmul.f32 %v305, %v309
    %vm311 = vweird.f32 %v261
    %vm312 = vweird.f32 %v305
    %vm313 = vmor %vm311, %vm312
    %v314 = vsel %vm313, %v305, %v310
    %v315 = vrsqrt.pop %v262
    %v316 = vmul.f32 %v315, %v262
    %v317 = vmul.f32 %v316, %v315
    %v318 = vmul.f32 0.5, %v317
    %v319 = vsub.f32 1.5, %v318
    %v320 = vmul.f32 %v315, %v319
    %vm321 = vweird.f32 %v262
    %vm322 = vweird.f32 %v315
    %vm323 = vmor %vm321, %vm322
    %v324 = vsel %vm323, %v315, %v320
    %v325 = vrsqrt.pop %v263
    %v326 = vmul.f32 %v325, %v263
    %v327 = vmul.f32 %v326, %v325
    %v328 = vmul.f32 0.5, %v327
    %v329 = vsub.f32 1.5, %v328
    %v330 = vmul.f32 %v325, %v329
    %vm331 = vweird.f32 %v263
    %vm332 = vweird.f32 %v325
    %vm333 = vmor %vm331, %vm332
    %v334 = vsel %vm333, %v325, %v330
    %v335 = vrsqrt.pop %v264
    %v336 = vmul.f32 %v335, %v264
    %v337 = vmul.f32 %v336, %v335
    %v338 = vmul.f32 0.5, %v337
    %v339 = vsub.f32 1.5, %v338
    %v340 = vmul.f32 %v335, %v339
    %vm341 = vweird.f32 %v264
    %vm342 = vweird.f32 %v335
    %vm343 = vmor %vm341, %vm342
    %v344 = vsel %vm343, %v335, %v340
    %v345 = vmul.f32 %v249, %v274
    %v346 = vmul.f32 %v250, %v284
    %v347 = vmul.f32 %v251, %v294
    %v348 = vmul.f32 %v252, %v304
    %v349 = vmul.f32 %v253, %v314
    %v350 = vmul.f32 %v254, %v324
    %v351 = vmul.f32 %v255, %v334
    %v352 = vmul.f32 %v256, %v344
    %v354 = vperm.slane %v160, 0
    %v356 = vmul.f32 %v345, %v354
    %v357 = vmul.f32 %v346, %v354
    %v358 = vmul.f32 %v347, %v354
    %v359 = vmul.f32 %v348, %v354
    %v360 = vmul.f32 %v349, %v354
    %v361 = vmul.f32 %v350, %v354
    %v362 = vmul.f32 %v351, %v354
    %v363 = vmul.f32 %v352, %v354
    %v365 = vperm.slane %v161, 0
    %v367 = vadd.f32 %v356, %v365
    %v368 = vadd.f32 %v357, %v365
    %v369 = vadd.f32 %v358, %v365
    %v370 = vadd.f32 %v359, %v365
    %v371 = vadd.f32 %v360, %v365
    %v372 = vadd.f32 %v361, %v365
    %v373 = vadd.f32 %v362, %v365
    %v374 = vadd.f32 %v363, %v365
    %375 = vadd.xlane.f32.xlu0 %v156
    %v376 = vpop.xlane.xlu0 %375
    %377 = vadd.xlane.f32.xlu0 %v157
    %v378 = vpop.xlane.xlu0 %377
    %379 = vadd.xlane.f32.xlu0 %v158
    %v380 = vpop.xlane.xlu0 %379
    %381 = vadd.xlane.f32.xlu0 %v159
    %v382 = vpop.xlane.xlu0 %381
    %v383 = vmul.f32 %v376, %v184
    %v384 = vmul.f32 %v378, %v184
    %v385 = vmul.f32 %v380, %v184
    %v386 = vmul.f32 %v382, %v184
    %v387 = vmul.f32 %v156, %v156
    %v388 = vmul.f32 %v157, %v157
    %v389 = vmul.f32 %v158, %v158
    %v390 = vmul.f32 %v159, %v159
    %391 = vadd.xlane.f32.xlu0 %v387
    %v392 = vpop.xlane.xlu0 %391
    %393 = vadd.xlane.f32.xlu0 %v388
    %v394 = vpop.xlane.xlu0 %393
    %395 = vadd.xlane.f32.xlu0 %v389
    %v396 = vpop.xlane.xlu0 %395
    %397 = vadd.xlane.f32.xlu0 %v390
    %v398 = vpop.xlane.xlu0 %397
    %v399 = vmul.f32 %v392, %v184
    %v400 = vmul.f32 %v394, %v184
    %v401 = vmul.f32 %v396, %v184
    %v402 = vmul.f32 %v398, %v184
    %v403 = vmul.f32 %v383, %v383
    %v404 = vmul.f32 %v384, %v384
    %v405 = vmul.f32 %v385, %v385
    %v406 = vmul.f32 %v386, %v386
    %v407 = vsub.f32 %v399, %v403
    %v408 = vsub.f32 %v400, %v404
    %v409 = vsub.f32 %v401, %v405
    %v410 = vsub.f32 %v402, %v406
    %v411 = vmax.f32 %v407, 0.0
    %v412 = vmax.f32 %v408, 0.0
    %v413 = vmax.f32 %v409, 0.0
    %v414 = vmax.f32 %v410, 0.0
    %v415 = vsub.f32 %v156, %v383
    %v416 = vsub.f32 %v157, %v384
    %v417 = vsub.f32 %v158, %v385
    %v418 = vsub.f32 %v159, %v386
    %v419 = vadd.f32 %v411, 1e-05
    %v420 = vadd.f32 %v412, 1e-05
    %v421 = vadd.f32 %v413, 1e-05
    %v422 = vadd.f32 %v414, 1e-05
    %v423 = vrsqrt.pop %v419
    %v424 = vmul.f32 %v423, %v419
    %v425 = vmul.f32 %v424, %v423
    %v426 = vmul.f32 0.5, %v425
    %v427 = vsub.f32 1.5, %v426
    %v428 = vmul.f32 %v423, %v427
    %vm429 = vweird.f32 %v419
    %vm430 = vweird.f32 %v423
    %vm431 = vmor %vm429, %vm430
    %v432 = vsel %vm431, %v423, %v428
    %v433 = vrsqrt.pop %v420
    %v434 = vmul.f32 %v433, %v420
    %v435 = vmul.f32 %v434, %v433
    %v436 = vmul.f32 0.5, %v435
    %v437 = vsub.f32 1.5, %v436
    %v438 = vmul.f32 %v433, %v437
    %vm439 = vweird.f32 %v420
    %vm440 = vweird.f32 %v433
    %vm441 = vmor %vm439, %vm440
    %v442 = vsel %vm441, %v433, %v438
    %v443 = vrsqrt.pop %v421
    %v444 = vmul.f32 %v443, %v421
    %v445 = vmul.f32 %v444, %v443
    %v446 = vmul.f32 0.5, %v445
    %v447 = vsub.f32 1.5, %v446
    %v448 = vmul.f32 %v443, %v447
    %vm449 = vweird.f32 %v421
    %vm450 = vweird.f32 %v443
    %vm451 = vmor %vm449, %vm450
    %v452 = vsel %vm451, %v443, %v448
    %v453 = vrsqrt.pop %v422
    %v454 = vmul.f32 %v453, %v422
    %v455 = vmul.f32 %v454, %v453
    %v456 = vmul.f32 0.5, %v455
    %v457 = vsub.f32 1.5, %v456
    %v458 = vmul.f32 %v453, %v457
    %vm459 = vweird.f32 %v422
    %vm460 = vweird.f32 %v453
    %vm461 = vmor %vm459, %vm460
    %v462 = vsel %vm461, %v453, %v458
    %v463 = vmul.f32 %v415, %v432
    %v464 = vmul.f32 %v416, %v442
    %v465 = vmul.f32 %v417, %v452
    %v466 = vmul.f32 %v418, %v462
    %v467 = vmul.f32 %v463, %v354
    %v468 = vmul.f32 %v464, %v354
    %v469 = vmul.f32 %v465, %v354
    %v470 = vmul.f32 %v466, %v354
    %v471 = vadd.f32 %v467, %v365
    %v472 = vadd.f32 %v468, %v365
    %v473 = vadd.f32 %v469, %v365
    %v474 = vadd.f32 %v470, %v365
    %v475 = vpack.c.bf16 %v367, %v367
    %v476 = vpack.c.bf16 %v368, %v368
    %v477 = vpack.c.bf16 %v369, %v369
    %v478 = vpack.c.bf16 %v370, %v370
    %v479 = vpack.c.bf16 %v371, %v371
    %v480 = vpack.c.bf16 %v372, %v372
    %v481 = vpack.c.bf16 %v373, %v373
    %v482 = vpack.c.bf16 %v374, %v374
    %v483 = vpack.c.bf16 %v471, %v471
    %v484 = vpack.c.bf16 %v472, %v472
    %v485 = vpack.c.bf16 %v473, %v473
    %v486 = vpack.c.bf16 %v474, %v474
    %v487 = vld [vmem:[%s4] sm:$0xf]
    %v488 = vld [vmem:[%s5] sm:$0xf]
    %vm489 = vcmask 64512
    %v491 = vsel %vm489, %v488, 0
    %vm493 = vcmask 1043456
    %v495 = vsel %vm493, %v483, 0
    %497 = vmatpush.bf16.msra.mxu0 0
    %498 = vmatpush.bf16.msra.mxu0 0
    %499 = vmatpush.bf16.msra.mxu0 0
    %500 = vmatpush.bf16.msra.mxu0 0
    %501 = vmatpush.bf16.msra.mxu0 0
    %502 = vmatpush.bf16.msra.mxu0 0
    %503 = vmatpush.bf16.msra.mxu0 0
    %504 = vmatpush.bf16.msra.mxu0 %v495
    %505 = vmatmul.bf16.gmra.mxu0 %v491
    %v506 = vpop.f32.mrf.mxu0
    %v507 = vadd.f32 0.0, %v506
    %v508 = vpop.f32.mrf.mxu0
    %509 = vdwg.mxu0
    %v511 = vsel %vm493, %v484, 0
    %513 = vmatpush.bf16.msra.mxu0 0
    %514 = vmatpush.bf16.msra.mxu0 0
    %515 = vmatpush.bf16.msra.mxu0 0
    %516 = vmatpush.bf16.msra.mxu0 0
    %517 = vmatpush.bf16.msra.mxu0 0
    %518 = vmatpush.bf16.msra.mxu0 0
    %519 = vmatpush.bf16.msra.mxu0 0
    %520 = vmatpush.bf16.msra.mxu0 %v511
    %521 = vmatmul.bf16.gmra.mxu0 %v491
    %v522 = vpop.f32.mrf.mxu0
    %v523 = vadd.f32 0.0, %v522
    %v524 = vpop.f32.mrf.mxu0
    %525 = vdwg.mxu0
    %v527 = vsel %vm493, %v485, 0
    %529 = vmatpush.bf16.msra.mxu0 0
    %530 = vmatpush.bf16.msra.mxu0 0
    %531 = vmatpush.bf16.msra.mxu0 0
    %532 = vmatpush.bf16.msra.mxu0 0
    %533 = vmatpush.bf16.msra.mxu0 0
    %534 = vmatpush.bf16.msra.mxu0 0
    %535 = vmatpush.bf16.msra.mxu0 0
    %536 = vmatpush.bf16.msra.mxu0 %v527
    %537 = vmatmul.bf16.gmra.mxu0 %v491
    %v538 = vpop.f32.mrf.mxu0
    %v539 = vadd.f32 0.0, %v538
    %v540 = vpop.f32.mrf.mxu0
    %541 = vdwg.mxu0
    %v543 = vsel %vm493, %v486, 0
    %545 = vmatpush.bf16.msra.mxu0 0
    %546 = vmatpush.bf16.msra.mxu0 0
    %547 = vmatpush.bf16.msra.mxu0 0
    %548 = vmatpush.bf16.msra.mxu0 0
    %549 = vmatpush.bf16.msra.mxu0 0
    %550 = vmatpush.bf16.msra.mxu0 0
    %551 = vmatpush.bf16.msra.mxu0 0
    %552 = vmatpush.bf16.msra.mxu0 %v543
    %553 = vmatmul.bf16.gmra.mxu0 %v491
    %v554 = vpop.f32.mrf.mxu0
    %v555 = vadd.f32 0.0, %v554
    %v556 = vpop.f32.mrf.mxu0
    %557 = vdwg.mxu0
    %v560 = vunpack.c.l.b16 %v475
    %v561 = vunpack.c.l.b16 %v476
    %v562 = vpack.c.b16 %v561, %v560
    %vm564 = vcmask 130048
    %v566 = vsel %vm564, %v487, 0
    %568 = vmatpush.bf16.msra.mxu0 0
    %569 = vmatpush.bf16.msra.mxu0 0
    %570 = vmatpush.bf16.msra.mxu0 0
    %571 = vmatpush.bf16.msra.mxu0 0
    %572 = vmatpush.bf16.msra.mxu0 0
    %573 = vmatpush.bf16.msra.mxu0 0
    %574 = vmatpush.bf16.msra.mxu0 0
    %575 = vmatpush.bf16.msra.mxu0 %v562
    %576 = vmatmul.bf16.gmra.mxu0 %v566
    %v577 = vpop.f32.mrf.mxu0
    %v578 = vadd.f32 %v507, %v577
    %v579 = vpop.f32.mrf.mxu0
    %580 = vdwg.mxu0
    %v583 = vunpack.c.l.b16 %v477
    %v584 = vunpack.c.l.b16 %v478
    %v585 = vpack.c.b16 %v584, %v583
    %587 = vmatpush.bf16.msra.mxu0 0
    %588 = vmatpush.bf16.msra.mxu0 0
    %589 = vmatpush.bf16.msra.mxu0 0
    %590 = vmatpush.bf16.msra.mxu0 0
    %591 = vmatpush.bf16.msra.mxu0 0
    %592 = vmatpush.bf16.msra.mxu0 0
    %593 = vmatpush.bf16.msra.mxu0 0
    %594 = vmatpush.bf16.msra.mxu0 %v585
    %595 = vmatmul.bf16.gmra.mxu0 %v566
    %v596 = vpop.f32.mrf.mxu0
    %v597 = vadd.f32 %v523, %v596
    %v598 = vpop.f32.mrf.mxu0
    %599 = vdwg.mxu0
    %v602 = vunpack.c.l.b16 %v479
    %v603 = vunpack.c.l.b16 %v480
    %v604 = vpack.c.b16 %v603, %v602
    %606 = vmatpush.bf16.msra.mxu0 0
    %607 = vmatpush.bf16.msra.mxu0 0
    %608 = vmatpush.bf16.msra.mxu0 0
    %609 = vmatpush.bf16.msra.mxu0 0
    %610 = vmatpush.bf16.msra.mxu0 0
    %611 = vmatpush.bf16.msra.mxu0 0
    %612 = vmatpush.bf16.msra.mxu0 0
    %613 = vmatpush.bf16.msra.mxu0 %v604
    %614 = vmatmul.bf16.gmra.mxu0 %v566
    %v615 = vpop.f32.mrf.mxu0
    %v616 = vadd.f32 %v539, %v615
    %v617 = vpop.f32.mrf.mxu0
    %618 = vdwg.mxu0
    %v621 = vunpack.c.l.b16 %v481
    %v622 = vunpack.c.l.b16 %v482
    %v623 = vpack.c.b16 %v622, %v621
    %625 = vmatpush.bf16.msra.mxu0 0
    %626 = vmatpush.bf16.msra.mxu0 0
    %627 = vmatpush.bf16.msra.mxu0 0
    %628 = vmatpush.bf16.msra.mxu0 0
    %629 = vmatpush.bf16.msra.mxu0 0
    %630 = vmatpush.bf16.msra.mxu0 0
    %631 = vmatpush.bf16.msra.mxu0 0
    %632 = vmatpush.bf16.msra.mxu0 %v623
    %633 = vmatmul.bf16.gmra.mxu0 %v566
    %v634 = vpop.f32.mrf.mxu0
    %v635 = vadd.f32 %v555, %v634
    %v636 = vpop.f32.mrf.mxu0
    %637 = vdwg.mxu0
    %v638 = vld [vmem:[%s6] sm:$0xff]
    %640 = vset.pattern.permute.xlu0 0
    %641 = vperm.xlu0 %640, %v638
    %v642 = vpop.permute.xlu0 %641
    %v644 = vadd.f32 %v578, %v642
    %v645 = vadd.f32 %v597, %v642
    %v646 = vadd.f32 %v616, %v642
    %v647 = vadd.f32 %v635, %v642
    %v648 = vmax.f32 %v644, 0.0
    %v649 = vmax.f32 %v645, 0.0
    %v650 = vmax.f32 %v646, 0.0
    %v651 = vmax.f32 %v647, 0.0
    %v652 = vadd.f32 %v648, %v156
    %v653 = vadd.f32 %v649, %v157
    %v654 = vadd.f32 %v650, %v158
    %v655 = vadd.f32 %v651, %v159
    %v656 = vld [vmem:[%s7] sm:$0x1]
    %v657 = vld [vmem:[%s8] sm:$0x1]
    %658 = vadd.xlane.f32.xlu0 %v652
    %v659 = vpop.xlane.xlu0 %658
    %660 = vadd.xlane.f32.xlu0 %v653
    %v661 = vpop.xlane.xlu0 %660
    %662 = vadd.xlane.f32.xlu0 %v654
    %v663 = vpop.xlane.xlu0 %662
    %664 = vadd.xlane.f32.xlu0 %v655
    %v665 = vpop.xlane.xlu0 %664
    %v666 = vmul.f32 %v659, %v184
    %v667 = vmul.f32 %v661, %v184
    %v668 = vmul.f32 %v663, %v184
    %v669 = vmul.f32 %v665, %v184
    %v670 = vmul.f32 %v652, %v652
    %v671 = vmul.f32 %v653, %v653
    %v672 = vmul.f32 %v654, %v654
    %v673 = vmul.f32 %v655, %v655
    %674 = vadd.xlane.f32.xlu0 %v670
    %v675 = vpop.xlane.xlu0 %674
    %676 = vadd.xlane.f32.xlu0 %v671
    %v677 = vpop.xlane.xlu0 %676
    %678 = vadd.xlane.f32.xlu0 %v672
    %v679 = vpop.xlane.xlu0 %678
    %680 = vadd.xlane.f32.xlu0 %v673
    %v681 = vpop.xlane.xlu0 %680
    %v682 = vmul.f32 %v675, %v184
    %v683 = vmul.f32 %v677, %v184
    %v684 = vmul.f32 %v679, %v184
    %v685 = vmul.f32 %v681, %v184
    %v686 = vmul.f32 %v666, %v666
    %v687 = vmul.f32 %v667, %v667
    %v688 = vmul.f32 %v668, %v668
    %v689 = vmul.f32 %v669, %v669
    %v690 = vsub.f32 %v682, %v686
    %v691 = vsub.f32 %v683, %v687
    %v692 = vsub.f32 %v684, %v688
    %v693 = vsub.f32 %v685, %v689
    %v694 = vmax.f32 %v690, 0.0
    %v695 = vmax.f32 %v691, 0.0
    %v696 = vmax.f32 %v692, 0.0
    %v697 = vmax.f32 %v693, 0.0
    %v698 = vsub.f32 %v652, %v666
    %v699 = vsub.f32 %v653, %v667
    %v700 = vsub.f32 %v654, %v668
    %v701 = vsub.f32 %v655, %v669
    %v702 = vadd.f32 %v694, 1e-05
    %v703 = vadd.f32 %v695, 1e-05
    %v704 = vadd.f32 %v696, 1e-05
    %v705 = vadd.f32 %v697, 1e-05
    %v706 = vrsqrt.pop %v702
    %v707 = vmul.f32 %v706, %v702
    %v708 = vmul.f32 %v707, %v706
    %v709 = vmul.f32 0.5, %v708
    %v710 = vsub.f32 1.5, %v709
    %v711 = vmul.f32 %v706, %v710
    %vm712 = vweird.f32 %v702
    %vm713 = vweird.f32 %v706
    %vm714 = vmor %vm712, %vm713
    %v715 = vsel %vm714, %v706, %v711
    %v716 = vrsqrt.pop %v703
    %v717 = vmul.f32 %v716, %v703
    %v718 = vmul.f32 %v717, %v716
    %v719 = vmul.f32 0.5, %v718
    %v720 = vsub.f32 1.5, %v719
    %v721 = vmul.f32 %v716, %v720
    %vm722 = vweird.f32 %v703
    %vm723 = vweird.f32 %v716
    %vm724 = vmor %vm722, %vm723
    %v725 = vsel %vm724, %v716, %v721
    %v726 = vrsqrt.pop %v704
    %v727 = vmul.f32 %v726, %v704
    %v728 = vmul.f32 %v727, %v726
    %v729 = vmul.f32 0.5, %v728
    %v730 = vsub.f32 1.5, %v729
    %v731 = vmul.f32 %v726, %v730
    %vm732 = vweird.f32 %v704
    %vm733 = vweird.f32 %v726
    %vm734 = vmor %vm732, %vm733
    %v735 = vsel %vm734, %v726, %v731
    %v736 = vrsqrt.pop %v705
    %v737 = vmul.f32 %v736, %v705
    %v738 = vmul.f32 %v737, %v736
    %v739 = vmul.f32 0.5, %v738
    %v740 = vsub.f32 1.5, %v739
    %v741 = vmul.f32 %v736, %v740
    %vm742 = vweird.f32 %v705
    %vm743 = vweird.f32 %v736
    %vm744 = vmor %vm742, %vm743
    %v745 = vsel %vm744, %v736, %v741
    %v746 = vmul.f32 %v698, %v715
    %v747 = vmul.f32 %v699, %v725
    %v748 = vmul.f32 %v700, %v735
    %v749 = vmul.f32 %v701, %v745
    %v751 = vperm.slane %v656, 0
    %v753 = vmul.f32 %v746, %v751
    %v754 = vmul.f32 %v747, %v751
    %v755 = vmul.f32 %v748, %v751
    %v756 = vmul.f32 %v749, %v751
    %v758 = vperm.slane %v657, 0
    %v760 = vadd.f32 %v753, %v758
    %v761 = vadd.f32 %v754, %v758
    %v762 = vadd.f32 %v755, %v758
    %v763 = vadd.f32 %v756, %v758
    %v764 = vpack.c.bf16 %v761, %v760
    %v765 = vpack.c.bf16 %v763, %v762
    %v766 = vld [vmem:[#allocation10] sm:$0xff]
    %v767 = vld [vmem:[#allocation10 + $0x8] sm:$0xff]
    %v768 = vld [vmem:[#allocation10 + $0x10] sm:$0xff]
    %v769 = vld [vmem:[#allocation10 + $0x18] sm:$0xff]
    %v770 = vld [vmem:[#allocation10 + $0x20] sm:$0xff]
    %v771 = vld [vmem:[#allocation10 + $0x28] sm:$0xff]
    %v772 = vld [vmem:[#allocation10 + $0x30] sm:$0xff]
    %v773 = vld [vmem:[#allocation10 + $0x38] sm:$0xff]
    %v774 = vld [vmem:[#allocation10 + $0x40] sm:$0xff]
    %v775 = vld [vmem:[#allocation10 + $0x48] sm:$0xff]
    %v776 = vld [vmem:[#allocation10 + $0x50] sm:$0xff]
    %v777 = vld [vmem:[#allocation10 + $0x58] sm:$0xff]
    %v778 = vld [vmem:[#allocation10 + $0x60] sm:$0xff]
    %v779 = vld [vmem:[#allocation10 + $0x68] sm:$0xff]
    %v780 = vld [vmem:[#allocation10 + $0x70] sm:$0xff]
    %v781 = vld [vmem:[#allocation10 + $0x78] sm:$0xff]
    %v782 = vld [vmem:[%s10] sm:$0x3]
    %v784 = vperm.slane %v782, 0
    %v785 = vperm.slane %v782, 1
    %v804 = vunpack.c.l.b16 %v766
    %v805 = vunpack.c.h.b16 %v766
    %v806 = vunpack.c.l.b16 %v767
    %v807 = vunpack.c.h.b16 %v767
    %v808 = vunpack.c.l.b16 %v768
    %v809 = vunpack.c.h.b16 %v768
    %v810 = vunpack.c.l.b16 %v769
    %v811 = vunpack.c.h.b16 %v769
    %v812 = vunpack.c.l.b16 %v770
    %v813 = vunpack.c.h.b16 %v770
    %v814 = vunpack.c.l.b16 %v771
    %v815 = vunpack.c.h.b16 %v771
    %v816 = vunpack.c.l.b16 %v772
    %v817 = vunpack.c.h.b16 %v772
    %v818 = vunpack.c.l.b16 %v773
    %v819 = vunpack.c.h.b16 %v773
    %v820 = vunpack.c.l.b16 %v774
    %v821 = vunpack.c.h.b16 %v774
    %v822 = vunpack.c.l.b16 %v775
    %v823 = vunpack.c.h.b16 %v775
    %v824 = vunpack.c.l.b16 %v776
    %v825 = vunpack.c.h.b16 %v776
    %v826 = vunpack.c.l.b16 %v777
    %v827 = vunpack.c.h.b16 %v777
    %v828 = vunpack.c.l.b16 %v778
    %v829 = vunpack.c.h.b16 %v778
    %v830 = vunpack.c.l.b16 %v779
    %v831 = vunpack.c.h.b16 %v779
    %v832 = vunpack.c.l.b16 %v780
    %v833 = vunpack.c.h.b16 %v780
    %v834 = vunpack.c.l.b16 %v781
    %v835 = vunpack.c.h.b16 %v781
    %v836 = vpack.c.b16 %v806, %v804
    %v837 = vpack.c.b16 %v807, %v805
    %v838 = vpack.c.b16 %v810, %v808
    %v839 = vpack.c.b16 %v811, %v809
    %v840 = vpack.c.b16 %v814, %v812
    %v841 = vpack.c.b16 %v815, %v813
    %v842 = vpack.c.b16 %v818, %v816
    %v843 = vpack.c.b16 %v819, %v817
    %v844 = vpack.c.b16 %v822, %v820
    %v845 = vpack.c.b16 %v823, %v821
    %v846 = vpack.c.b16 %v826, %v824
    %v847 = vpack.c.b16 %v827, %v825
    %v848 = vpack.c.b16 %v830, %v828
    %v849 = vpack.c.b16 %v831, %v829
    %v850 = vpack.c.b16 %v834, %v832
    %v851 = vpack.c.b16 %v835, %v833
    %868 = vmatpush.bf16.msra.mxu0 %v850
    %869 = vmatpush.bf16.msra.mxu0 %v848
    %870 = vmatpush.bf16.msra.mxu0 %v846
    %871 = vmatpush.bf16.msra.mxu0 %v844
    %872 = vmatpush.bf16.msra.mxu0 %v842
    %873 = vmatpush.bf16.msra.mxu0 %v840
    %874 = vmatpush.bf16.msra.mxu0 %v838
    %875 = vmatpush.bf16.msra.mxu0 %v836
    %876 = vmatmul.bf16.gmra.mxu0 %v764
    %v877 = vpop.f32.mrf.mxu0
    %v878 = vadd.f32 %v784, %v877
    %v879 = vpop.f32.mrf.mxu0
    %v880 = vadd.f32 %v784, %v879
    %881 = vmatmul.bf16.gmra.mxu0 %v765
    %v882 = vpop.f32.mrf.mxu0
    %v883 = vadd.f32 %v784, %v882
    %v884 = vpop.f32.mrf.mxu0
    %v885 = vadd.f32 %v784, %v884
    %886 = vdwg.mxu0
    %887 = vmatpush.bf16.msra.mxu0 %v851
    %888 = vmatpush.bf16.msra.mxu0 %v849
    %889 = vmatpush.bf16.msra.mxu0 %v847
    %890 = vmatpush.bf16.msra.mxu0 %v845
    %891 = vmatpush.bf16.msra.mxu0 %v843
    %892 = vmatpush.bf16.msra.mxu0 %v841
    %893 = vmatpush.bf16.msra.mxu0 %v839
    %894 = vmatpush.bf16.msra.mxu0 %v837
    %895 = vmatmul.bf16.gmra.mxu0 %v764
    %v896 = vpop.f32.mrf.mxu0
    %v897 = vadd.f32 %v785, %v896
    %v898 = vpop.f32.mrf.mxu0
    %v899 = vadd.f32 %v785, %v898
    %900 = vmatmul.bf16.gmra.mxu0 %v765
    %v901 = vpop.f32.mrf.mxu0
    %v902 = vadd.f32 %v785, %v901
    %v903 = vpop.f32.mrf.mxu0
    %v904 = vadd.f32 %v785, %v903
    %905 = vdwg.mxu0
    %v906 = vmax.f32 %v878, 0.0
    %v907 = vmax.f32 %v897, 0.0
    %v908 = vmax.f32 %v880, 0.0
    %v909 = vmax.f32 %v899, 0.0
    %v910 = vmax.f32 %v883, 0.0
    %v911 = vmax.f32 %v902, 0.0
    %v912 = vmax.f32 %v885, 0.0
    %v913 = vmax.f32 %v904, 0.0
    %v914 = vpack.c.bf16 %v908, %v906
    %v915 = vpack.c.bf16 %v909, %v907
    %v916 = vpack.c.bf16 %v912, %v910
    %v917 = vpack.c.bf16 %v913, %v911
    %v918 = vld [vmem:[#allocation11] sm:$0xf]
    %v919 = vld [vmem:[#allocation11 + $0x4] sm:$0xf]
    %v920 = vld [vmem:[#allocation11 + $0x8] sm:$0xf]
    %v921 = vld [vmem:[#allocation11 + $0xc] sm:$0xf]
    %v922 = vld [vmem:[#allocation11 + $0x10] sm:$0xf]
    %v923 = vld [vmem:[#allocation11 + $0x14] sm:$0xf]
    %v924 = vld [vmem:[#allocation11 + $0x18] sm:$0xf]
    %v925 = vld [vmem:[#allocation11 + $0x1c] sm:$0xf]
    %v926 = vld [vmem:[#allocation11 + $0x20] sm:$0xf]
    %v927 = vld [vmem:[#allocation11 + $0x24] sm:$0xf]
    %v928 = vld [vmem:[#allocation11 + $0x28] sm:$0xf]
    %v929 = vld [vmem:[#allocation11 + $0x2c] sm:$0xf]
    %v930 = vld [vmem:[#allocation11 + $0x30] sm:$0xf]
    %v931 = vld [vmem:[#allocation11 + $0x34] sm:$0xf]
    %v932 = vld [vmem:[#allocation11 + $0x38] sm:$0xf]
    %v933 = vld [vmem:[#allocation11 + $0x3c] sm:$0xf]
    %v934 = vld [vmem:[#allocation11 + $0x40] sm:$0xf]
    %v935 = vld [vmem:[#allocation11 + $0x44] sm:$0xf]
    %v936 = vld [vmem:[#allocation11 + $0x48] sm:$0xf]
    %v937 = vld [vmem:[#allocation11 + $0x4c] sm:$0xf]
    %v938 = vld [vmem:[#allocation11 + $0x50] sm:$0xf]
    %v939 = vld [vmem:[#allocation11 + $0x54] sm:$0xf]
    %v940 = vld [vmem:[#allocation11 + $0x58] sm:$0xf]
    %v941 = vld [vmem:[#allocation11 + $0x5c] sm:$0xf]
    %v942 = vld [vmem:[#allocation11 + $0x60] sm:$0xf]
    %v943 = vld [vmem:[#allocation11 + $0x64] sm:$0xf]
    %v944 = vld [vmem:[#allocation11 + $0x68] sm:$0xf]
    %v945 = vld [vmem:[#allocation11 + $0x6c] sm:$0xf]
    %v946 = vld [vmem:[#allocation11 + $0x70] sm:$0xf]
    %v947 = vld [vmem:[#allocation11 + $0x74] sm:$0xf]
    %v948 = vld [vmem:[#allocation11 + $0x78] sm:$0xf]
    %v949 = vld [vmem:[#allocation11 + $0x7c] sm:$0xf]
    %v950 = vld [vmem:[%s12] sm:$0x1]
    %v952 = vperm.slane %v950, 0
    %v986 = vunpack.c.l.b16 %v918
    %v987 = vunpack.c.l.b16 %v919
    %v988 = vunpack.c.l.b16 %v920
    %v989 = vunpack.c.l.b16 %v921
    %v990 = vunpack.c.l.b16 %v922
    %v991 = vunpack.c.l.b16 %v923
    %v992 = vunpack.c.l.b16 %v924
    %v993 = vunpack.c.l.b16 %v925
    %v994 = vunpack.c.l.b16 %v926
    %v995 = vunpack.c.l.b16 %v927
    %v996 = vunpack.c.l.b16 %v928
    %v997 = vunpack.c.l.b16 %v929
    %v998 = vunpack.c.l.b16 %v930
    %v999 = vunpack.c.l.b16 %v931
    %v1000 = vunpack.c.l.b16 %v932
    %v1001 = vunpack.c.l.b16 %v933
    %v1002 = vunpack.c.l.b16 %v934
    %v1003 = vunpack.c.l.b16 %v935
    %v1004 = vunpack.c.l.b16 %v936
    %v1005 = vunpack.c.l.b16 %v937
    %v1006 = vunpack.c.l.b16 %v938
    %v1007 = vunpack.c.l.b16 %v939
    %v1008 = vunpack.c.l.b16 %v940
    %v1009 = vunpack.c.l.b16 %v941
    %v1010 = vunpack.c.l.b16 %v942
    %v1011 = vunpack.c.l.b16 %v943
    %v1012 = vunpack.c.l.b16 %v944
    %v1013 = vunpack.c.l.b16 %v945
    %v1014 = vunpack.c.l.b16 %v946
    %v1015 = vunpack.c.l.b16 %v947
    %v1016 = vunpack.c.l.b16 %v948
    %v1017 = vunpack.c.l.b16 %v949
    %v1018 = vpack.c.b16 %v987, %v986
    %v1019 = vpack.c.b16 %v989, %v988
    %v1020 = vpack.c.b16 %v991, %v990
    %v1021 = vpack.c.b16 %v993, %v992
    %v1022 = vpack.c.b16 %v995, %v994
    %v1023 = vpack.c.b16 %v997, %v996
    %v1024 = vpack.c.b16 %v999, %v998
    %v1025 = vpack.c.b16 %v1001, %v1000
    %v1026 = vpack.c.b16 %v1003, %v1002
    %v1027 = vpack.c.b16 %v1005, %v1004
    %v1028 = vpack.c.b16 %v1007, %v1006
    %v1029 = vpack.c.b16 %v1009, %v1008
    %v1030 = vpack.c.b16 %v1011, %v1010
    %v1031 = vpack.c.b16 %v1013, %v1012
    %v1032 = vpack.c.b16 %v1015, %v1014
    %v1033 = vpack.c.b16 %v1017, %v1016
    %1050 = vmatpush.bf16.msra.mxu0 %v1025
    %1051 = vmatpush.bf16.msra.mxu0 %v1024
    %1052 = vmatpush.bf16.msra.mxu0 %v1023
    %1053 = vmatpush.bf16.msra.mxu0 %v1022
    %1054 = vmatpush.bf16.msra.mxu0 %v1021
    %1055 = vmatpush.bf16.msra.mxu0 %v1020
    %1056 = vmatpush.bf16.msra.mxu0 %v1019
    %1057 = vmatpush.bf16.msra.mxu0 %v1018
    %1058 = vmatmul.bf16.gmra.mxu0 %v914
    %v1059 = vpop.f32.mrf.mxu0
    %v1060 = vadd.f32 %v952, %v1059
    %v1061 = vpop.f32.mrf.mxu0
    %v1062 = vadd.f32 %v952, %v1061
    %1063 = vmatmul.bf16.gmra.mxu0 %v916
    %v1064 = vpop.f32.mrf.mxu0
    %v1065 = vadd.f32 %v952, %v1064
    %v1066 = vpop.f32.mrf.mxu0
    %v1067 = vadd.f32 %v952, %v1066
    %1068 = vdwg.mxu0
    %1069 = vmatpush.bf16.msra.mxu0 %v1033
    %1070 = vmatpush.bf16.msra.mxu0 %v1032
    %1071 = vmatpush.bf16.msra.mxu0 %v1031
    %1072 = vmatpush.bf16.msra.mxu0 %v1030
    %1073 = vmatpush.bf16.msra.mxu0 %v1029
    %1074 = vmatpush.bf16.msra.mxu0 %v1028
    %1075 = vmatpush.bf16.msra.mxu0 %v1027
    %1076 = vmatpush.bf16.msra.mxu0 %v1026
    %1077 = vmatmul.bf16.gmra.mxu0 %v915
    %v1078 = vpop.f32.mrf.mxu0
    %v1079 = vadd.f32 %v1060, %v1078
    %v1080 = vpop.f32.mrf.mxu0
    %v1081 = vadd.f32 %v1062, %v1080
    %1082 = vmatmul.bf16.gmra.mxu0 %v917
    %v1083 = vpop.f32.mrf.mxu0
    %v1084 = vadd.f32 %v1065, %v1083
    %v1085 = vpop.f32.mrf.mxu0
    %v1086 = vadd.f32 %v1067, %v1085
    %1087 = vdwg.mxu0
    %v1088 = vadd.f32 %v1079, %v652
    %v1089 = vadd.f32 %v1081, %v653
    %v1090 = vadd.f32 %v1084, %v654
    %v1091 = vadd.f32 %v1086, %v655
    %v1092 = vpack.c.bf16 %v1088, %v1088
    %v1093 = vpack.c.bf16 %v1089, %v1089
    %v1094 = vpack.c.bf16 %v1090, %v1090
    %v1095 = vpack.c.bf16 %v1091, %v1091
    %1096 = vst [vmem:[#allocation13] sm:$0xf] %v1092
    %1097 = vst [vmem:[#allocation13 + $0x4] sm:$0xf] %v1093
    %1098 = vst [vmem:[#allocation13 + $0x8] sm:$0xf] %v1094
    %1099 = vst [vmem:[#allocation13 + $0xc] sm:$0xf] %v1095
    // Predicated region
    $region78: #{tpu_custom_call.1} parent=1 // pred_check
      _
    $region79: #{tpu_custom_call.1} parent=1 // pred_check_branch
      %1101 = sbr.rel (0) target = $region81
    $region80: #{tpu_custom_call.1} parent=1 // pred_region
      %1103 = vsyncadd [#allocation4], 0
      %s1104 = sshll.u32 [#allocation13], 4
      %s1105 = int_to_ptr.vmem [resolvable:$true] %s1104
      %s1106 = sshll.u32 %s13, 4
      %s1107 = int_to_ptr.hbm [resolvable:$true] %s1106
      %1112 = dma.vmem_to_hbm [thread:$0]  %s1105, 256, %s1107, [#allocation4], 64, 64, 4
    $region81: #{tpu_custom_call.1} parent=1 // pred_fallthru
      _
    // Predicated region
    $region82: #{tpu_custom_call.1} parent=1 // pred_check
      _
    $region83: #{tpu_custom_call.1} parent=1 // pred_check_branch
      %1114 = sbr.rel (0) target = $region85
    $region84: #{tpu_custom_call.1} parent=1 // pred_region
      %1116 = dma.done [#allocation4], 256
    $region85: #{tpu_custom_call.1} parent=1 // pred_fallthru
      _
    %1117 = vsyncpa [#allocation3], 1
    %1118 = vsyncpa [#allocation6], 1
    %1119 = vsyncpa [#allocation9], 1
    %1120 = vsyncpa [#allocation12], 1
    %1121 = vsyncpa [#allocation4], 1

</llo_original>
